<compile_context>
chip_gen: v6e
topology: v6e:2x2x1
jax: 0.10.0
libtpu: 0.0.40
codegen_flags: <defaults>
</compile_context>

<pallas_src>
import jax
import jax.numpy as jnp
from jax.experimental import pallas as pl
from jax.experimental.pallas import tpu as pltpu
import numpy as np


CHUNK = 8      # token rows gathered per DMA wave (one f32 sublane group)
SUBLANE = 8    # f32 sublane tile height


def _prefix_embed_kernel(ids_ref,      # SMEM (B, S) int32   [scalar prefetch]
                         prefix_ref,   # VMEM (P, D)
                         emb_hbm,      # HBM  (V, D)         [memory_space=pl.ANY]
                         out_ref,      # VMEM (1, P+S, D)
                         rowbuf,       # VMEM (3*CHUNK, D)   gather scratch
                         sems):        # DMA semaphores (3*CHUNK,)
    b = pl.program_id(0)
    P, D = prefix_ref.shape
    S = ids_ref.shape[1]
    V = emb_hbm.shape[0]

    # Static gather schedule: an unaligned "head" (brings the token region onto
    # an 8-sublane boundary), n_full aligned CHUNK-row chunks (double
    # buffered), and an aligned partial "tail".
    head = min((-P) % SUBLANE, S)
    n_full = (S - head) // CHUNK
    tail = S - head - n_full * CHUNK
    aligned_base = P + head            # multiple of 8 whenever n_full/tail > 0
    AUX = 2 * CHUNK                    # scratch region used by head/tail rows

    def start_row(tok_idx, buf_idx):
        # Clamp untrusted ids so the HBM DMA can never go out of bounds.
        tok = jnp.clip(ids_ref[b, tok_idx], 0, V - 1)
        pltpu.make_async_copy(emb_hbm.at[pl.ds(tok, 1)],
                              rowbuf.at[pl.ds(buf_idx, 1)],
                              sems.at[buf_idx]).start()

    def wait_row(buf_idx):
        pltpu.make_async_copy(emb_hbm.at[pl.ds(0, 1)],
                              rowbuf.at[pl.ds(buf_idx, 1)],
                              sems.at[buf_idx]).wait()

    def start_chunk(c, slot):          # c may be traced; CHUNK rows
        base = head + c * CHUNK
        for r in range(CHUNK):
            start_row(base + r, slot * CHUNK + r)

    def wait_chunk(slot):
        for r in range(CHUNK):
            wait_row(slot * CHUNK + r)

    # ---- prologue: kick off head rows + first full chunk, then write the
    # prefix block so its VMEM store overlaps the in-flight HBM row fetches. --
    if head > 0:
        for r in range(head):
            start_row(r, AUX + r)
    if n_full > 0:
        start_chunk(0, 0)

    out_ref[0, :P, :] = prefix_ref[...].astype(out_ref.dtype)

    if head > 0:
        for r in range(head):
            wait_row(AUX + r)
        out_ref[0, pl.ds(P, head), :] = rowbuf[AUX:AUX + head, :]

    # ---- main gather: double-buffered CHUNK-row DMAs, aligned bulk stores ----
    if n_full > 0:
        @pl.loop(0, n_full)
        def _(c):
            slot = c % 2

            @pl.when(c + 1 < n_full)
            def _():
                start_chunk(c + 1, 1 - slot)

            wait_chunk(slot)
            src = pl.multiple_of(slot * CHUNK, SUBLANE)
            dst = pl.multiple_of(aligned_base + c * CHUNK, SUBLANE)
            out_ref[0, pl.ds(dst, CHUNK), :] = rowbuf[pl.ds(src, CHUNK), :]

    # ---- tail: < CHUNK rows, aligned start, single partial store ------------
    if tail > 0:
        t0 = head + n_full * CHUNK
        for r in range(tail):
            start_row(t0 + r, AUX + r)
        for r in range(tail):
            wait_row(AUX + r)
        out_ref[0, pl.ds(aligned_base + n_full * CHUNK, tail), :] = \
            rowbuf[AUX:AUX + tail, :]


def t5_prefix_tuning_frontend(input_ids, attention_mask, prefixes, emb_table):
    """Returns (encoder_embeds (B, P+S, D), attention_mask_out (B, P+S))."""
    B, S = input_ids.shape
    P, D = prefixes.shape
    L = P + S

    grid_spec = pltpu.PrefetchScalarGridSpec(
        num_scalar_prefetch=1,                 # input_ids -> SMEM
        grid=(B,),
        in_specs=[
            pl.BlockSpec((P, D), lambda b, ids: (0, 0)),   # learned prefixes
            pl.BlockSpec(memory_space=pl.ANY),             # emb table stays in HBM
        ],
        out_specs=pl.BlockSpec((1, L, D), lambda b, ids: (b, 0, 0)),
        scratch_shapes=[
            pltpu.VMEM((3 * CHUNK, D), emb_table.dtype),   # gather double-buffer + aux
            pltpu.SemaphoreType.DMA((3 * CHUNK,)),
        ],
    )

    out_embeds = pl.pallas_call(
        _prefix_embed_kernel,
        grid_spec=grid_spec,
        out_shape=jax.ShapeDtypeStruct((B, L, D), emb_table.dtype),
        compiler_params=pltpu.CompilerParams(
            dimension_semantics=("parallel",)),
    )(input_ids.astype(jnp.int32), prefixes, emb_table)

    # Trivial, lane-sparse mask concat stays in plain XLA (per perf review).
    mask_out = jnp.concatenate(
        [jnp.ones((B, P), dtype=attention_mask.dtype), attention_mask], axis=1)
    return out_embeds, mask_out


if __name__ == "__main__":
    # Small synthetic shapes (vocab shrunk from 32128 -> 512; hidden kept at 768
    # since it is hard-coded in the module).  S=26 exercises the head / full /
    # tail phases of the gather plus double buffering.
    B, S = 2, 26
    P = 50            # n_prefixes default in the module
    D = 768
    V = 512

    key = jax.random.PRNGKey(0)
    k_pref, k_emb, k_ids, k_mask = jax.random.split(key, 4)

    # nn.Parameter(torch.empty((P, 768)).normal_(0, 0.1))
    prefixes = jax.random.normal(k_pref, (P, D), dtype=jnp.float32) * 0.1
    # model.shared embedding table (synthetic, deterministic)
    emb_table = jax.random.normal(k_emb, (V, D), dtype=jnp.float32) * 0.02
    input_ids = jax.random.randint(k_ids, (B, S), 0, V, dtype=jnp.int32)
    attention_mask = (jax.random.uniform(k_mask, (B, S)) > 0.2).astype(jnp.float32)

    enc_embeds, attn_mask_out = t5_prefix_tuning_frontend(
        input_ids, attention_mask, prefixes, emb_table)
    jax.block_until_ready((enc_embeds, attn_mask_out))

    # Pure-JAX reference for correctness.
    ref_embeds = jnp.concatenate(
        [jnp.broadcast_to(prefixes[None], (B, P, D)), emb_table[input_ids]], axis=1)
    ref_mask = jnp.concatenate(
        [jnp.ones((B, P), jnp.float32), attention_mask], axis=1)

    assert enc_embeds.shape == (B, P + S, D)
    assert attn_mask_out.shape == (B, P + S)
    np.testing.assert_allclose(np.asarray(enc_embeds), np.asarray(ref_embeds),
                               rtol=1e-6, atol=1e-6)
    np.testing.assert_allclose(np.asarray(attn_mask_out), np.asarray(ref_mask),
                               rtol=1e-6, atol=1e-6)

    print("KERNEL_OK")
</pallas_src>

<mosaic_0001>
module attributes {stable_mosaic.version = 11 : i64} {
  func.func @_prefix_embed_kernel(%arg0: i32, %arg1: memref<2x26xi32, #tpu.memory_space<smem>>, %arg2: memref<50x768xf32, #tpu.memory_space<vmem>>, %arg3: memref<512x768xf32, #tpu.memory_space<any>>, %arg4: memref<1x76x768xf32, #tpu.memory_space<vmem>>, %arg5: memref<24x768xf32, #tpu.memory_space<vmem>>, %arg6: memref<24x!tpu.dma_semaphore, #tpu.memory_space<semaphore_mem>>) attributes {dimension_semantics = [#tpu.dimension_semantics<parallel>], iteration_bounds = array<i64: 2>, scalar_prefetch = 1 : i64, scratch_operands = 2 : i64, tpu.core_type = #tpu.core_type<tc>, window_params = [{pipeline_mode = #tpu.pipeline_mode<synchronous>, transform_indices = @transform_0, window_bounds = array<i64: 50, 768>}, {}, {transform_indices = @transform_2, window_bounds = array<i64: 1, 76, 768>}]} {
    %0 = arith.index_cast %arg0 : i32 to index
    %c0 = arith.constant 0 : index
    %1 = memref.load %arg1[%0, %c0] : memref<2x26xi32, #tpu.memory_space<smem>>
    %c0_i32 = arith.constant 0 : i32
    %c511_i32 = arith.constant 511 : i32
    %2 = arith.maxsi %c0_i32, %1 : i32
    %3 = arith.minsi %c511_i32, %2 : i32
    %c16_i32 = arith.constant 16 : i32
    %c0_i32_0 = arith.constant 0 : i32
    %4 = tpu.memref_slice %arg3[%3, %c0_i32_0] : memref<512x768xf32, #tpu.memory_space<any>> -> memref<1x768xf32, #tpu.memory_space<any>>
    %c16_i32_1 = arith.constant 16 : i32
    %c0_i32_2 = arith.constant 0 : i32
    %5 = tpu.memref_slice %arg5[%c16_i32_1, %c0_i32_2] : memref<24x768xf32, #tpu.memory_space<vmem>> -> memref<1x768xf32, #tpu.memory_space<vmem>>
    %6 = tpu.memref_slice %arg6[%c16_i32] : memref<24x!tpu.dma_semaphore, #tpu.memory_space<semaphore_mem>> -> memref<1x!tpu.dma_semaphore, #tpu.memory_space<semaphore_mem>>
    %7 = tpu.memref_squeeze %6 : memref<1x!tpu.dma_semaphore, #tpu.memory_space<semaphore_mem>> -> memref<!tpu.dma_semaphore, #tpu.memory_space<semaphore_mem>>
    tpu.enqueue_dma source(%4 : memref<1x768xf32, #tpu.memory_space<any>>) target(%5 : memref<1x768xf32, #tpu.memory_space<vmem>>) target_semaphore(%7 : memref<!tpu.dma_semaphore, #tpu.memory_space<semaphore_mem>>)
    %8 = arith.index_cast %arg0 : i32 to index
    %c1 = arith.constant 1 : index
    %9 = memref.load %arg1[%8, %c1] : memref<2x26xi32, #tpu.memory_space<smem>>
    %c0_i32_3 = arith.constant 0 : i32
    %c511_i32_4 = arith.constant 511 : i32
    %10 = arith.maxsi %c0_i32_3, %9 : i32
    %11 = arith.minsi %c511_i32_4, %10 : i32
    %c17_i32 = arith.constant 17 : i32
    %c0_i32_5 = arith.constant 0 : i32
    %12 = tpu.memref_slice %arg3[%11, %c0_i32_5] : memref<512x768xf32, #tpu.memory_space<any>> -> memref<1x768xf32, #tpu.memory_space<any>>
    %c17_i32_6 = arith.constant 17 : i32
    %c0_i32_7 = arith.constant 0 : i32
    %13 = tpu.memref_slice %arg5[%c17_i32_6, %c0_i32_7] : memref<24x768xf32, #tpu.memory_space<vmem>> -> memref<1x768xf32, #tpu.memory_space<vmem>>
    %14 = tpu.memref_slice %arg6[%c17_i32] : memref<24x!tpu.dma_semaphore, #tpu.memory_space<semaphore_mem>> -> memref<1x!tpu.dma_semaphore, #tpu.memory_space<semaphore_mem>>
    %15 = tpu.memref_squeeze %14 : memref<1x!tpu.dma_semaphore, #tpu.memory_space<semaphore_mem>> -> memref<!tpu.dma_semaphore, #tpu.memory_space<semaphore_mem>>
    tpu.enqueue_dma source(%12 : memref<1x768xf32, #tpu.memory_space<any>>) target(%13 : memref<1x768xf32, #tpu.memory_space<vmem>>) target_semaphore(%15 : memref<!tpu.dma_semaphore, #tpu.memory_space<semaphore_mem>>)
    %16 = arith.index_cast %arg0 : i32 to index
    %c2 = arith.constant 2 : index
    %17 = memref.load %arg1[%16, %c2] : memref<2x26xi32, #tpu.memory_space<smem>>
    %c0_i32_8 = arith.constant 0 : i32
    %c511_i32_9 = arith.constant 511 : i32
    %18 = arith.maxsi %c0_i32_8, %17 : i32
    %19 = arith.minsi %c511_i32_9, %18 : i32
    %c18_i32 = arith.constant 18 : i32
    %c0_i32_10 = arith.constant 0 : i32
    %20 = tpu.memref_slice %arg3[%19, %c0_i32_10] : memref<512x768xf32, #tpu.memory_space<any>> -> memref<1x768xf32, #tpu.memory_space<any>>
    %c18_i32_11 = arith.constant 18 : i32
    %c0_i32_12 = arith.constant 0 : i32
    %21 = tpu.memref_slice %arg5[%c18_i32_11, %c0_i32_12] : memref<24x768xf32, #tpu.memory_space<vmem>> -> memref<1x768xf32, #tpu.memory_space<vmem>>
    %22 = tpu.memref_slice %arg6[%c18_i32] : memref<24x!tpu.dma_semaphore, #tpu.memory_space<semaphore_mem>> -> memref<1x!tpu.dma_semaphore, #tpu.memory_space<semaphore_mem>>
    %23 = tpu.memref_squeeze %22 : memref<1x!tpu.dma_semaphore, #tpu.memory_space<semaphore_mem>> -> memref<!tpu.dma_semaphore, #tpu.memory_space<semaphore_mem>>
    tpu.enqueue_dma source(%20 : memref<1x768xf32, #tpu.memory_space<any>>) target(%21 : memref<1x768xf32, #tpu.memory_space<vmem>>) target_semaphore(%23 : memref<!tpu.dma_semaphore, #tpu.memory_space<semaphore_mem>>)
    %24 = arith.index_cast %arg0 : i32 to index
    %c3 = arith.constant 3 : index
    %25 = memref.load %arg1[%24, %c3] : memref<2x26xi32, #tpu.memory_space<smem>>
    %c0_i32_13 = arith.constant 0 : i32
    %c511_i32_14 = arith.constant 511 : i32
    %26 = arith.maxsi %c0_i32_13, %25 : i32
    %27 = arith.minsi %c511_i32_14, %26 : i32
    %c19_i32 = arith.constant 19 : i32
    %c0_i32_15 = arith.constant 0 : i32
    %28 = tpu.memref_slice %arg3[%27, %c0_i32_15] : memref<512x768xf32, #tpu.memory_space<any>> -> memref<1x768xf32, #tpu.memory_space<any>>
    %c19_i32_16 = arith.constant 19 : i32
    %c0_i32_17 = arith.constant 0 : i32
    %29 = tpu.memref_slice %arg5[%c19_i32_16, %c0_i32_17] : memref<24x768xf32, #tpu.memory_space<vmem>> -> memref<1x768xf32, #tpu.memory_space<vmem>>
    %30 = tpu.memref_slice %arg6[%c19_i32] : memref<24x!tpu.dma_semaphore, #tpu.memory_space<semaphore_mem>> -> memref<1x!tpu.dma_semaphore, #tpu.memory_space<semaphore_mem>>
    %31 = tpu.memref_squeeze %30 : memref<1x!tpu.dma_semaphore, #tpu.memory_space<semaphore_mem>> -> memref<!tpu.dma_semaphore, #tpu.memory_space<semaphore_mem>>
    tpu.enqueue_dma source(%28 : memref<1x768xf32, #tpu.memory_space<any>>) target(%29 : memref<1x768xf32, #tpu.memory_space<vmem>>) target_semaphore(%31 : memref<!tpu.dma_semaphore, #tpu.memory_space<semaphore_mem>>)
    %32 = arith.index_cast %arg0 : i32 to index
    %c4 = arith.constant 4 : index
    %33 = memref.load %arg1[%32, %c4] : memref<2x26xi32, #tpu.memory_space<smem>>
    %c0_i32_18 = arith.constant 0 : i32
    %c511_i32_19 = arith.constant 511 : i32
    %34 = arith.maxsi %c0_i32_18, %33 : i32
    %35 = arith.minsi %c511_i32_19, %34 : i32
    %c20_i32 = arith.constant 20 : i32
    %c0_i32_20 = arith.constant 0 : i32
    %36 = tpu.memref_slice %arg3[%35, %c0_i32_20] : memref<512x768xf32, #tpu.memory_space<any>> -> memref<1x768xf32, #tpu.memory_space<any>>
    %c20_i32_21 = arith.constant 20 : i32
    %c0_i32_22 = arith.constant 0 : i32
    %37 = tpu.memref_slice %arg5[%c20_i32_21, %c0_i32_22] : memref<24x768xf32, #tpu.memory_space<vmem>> -> memref<1x768xf32, #tpu.memory_space<vmem>>
    %38 = tpu.memref_slice %arg6[%c20_i32] : memref<24x!tpu.dma_semaphore, #tpu.memory_space<semaphore_mem>> -> memref<1x!tpu.dma_semaphore, #tpu.memory_space<semaphore_mem>>
    %39 = tpu.memref_squeeze %38 : memref<1x!tpu.dma_semaphore, #tpu.memory_space<semaphore_mem>> -> memref<!tpu.dma_semaphore, #tpu.memory_space<semaphore_mem>>
    tpu.enqueue_dma source(%36 : memref<1x768xf32, #tpu.memory_space<any>>) target(%37 : memref<1x768xf32, #tpu.memory_space<vmem>>) target_semaphore(%39 : memref<!tpu.dma_semaphore, #tpu.memory_space<semaphore_mem>>)
    %40 = arith.index_cast %arg0 : i32 to index
    %c5 = arith.constant 5 : index
    %41 = memref.load %arg1[%40, %c5] : memref<2x26xi32, #tpu.memory_space<smem>>
    %c0_i32_23 = arith.constant 0 : i32
    %c511_i32_24 = arith.constant 511 : i32
    %42 = arith.maxsi %c0_i32_23, %41 : i32
    %43 = arith.minsi %c511_i32_24, %42 : i32
    %c21_i32 = arith.constant 21 : i32
    %c0_i32_25 = arith.constant 0 : i32
    %44 = tpu.memref_slice %arg3[%43, %c0_i32_25] : memref<512x768xf32, #tpu.memory_space<any>> -> memref<1x768xf32, #tpu.memory_space<any>>
    %c21_i32_26 = arith.constant 21 : i32
    %c0_i32_27 = arith.constant 0 : i32
    %45 = tpu.memref_slice %arg5[%c21_i32_26, %c0_i32_27] : memref<24x768xf32, #tpu.memory_space<vmem>> -> memref<1x768xf32, #tpu.memory_space<vmem>>
    %46 = tpu.memref_slice %arg6[%c21_i32] : memref<24x!tpu.dma_semaphore, #tpu.memory_space<semaphore_mem>> -> memref<1x!tpu.dma_semaphore, #tpu.memory_space<semaphore_mem>>
    %47 = tpu.memref_squeeze %46 : memref<1x!tpu.dma_semaphore, #tpu.memory_space<semaphore_mem>> -> memref<!tpu.dma_semaphore, #tpu.memory_space<semaphore_mem>>
    tpu.enqueue_dma source(%44 : memref<1x768xf32, #tpu.memory_space<any>>) target(%45 : memref<1x768xf32, #tpu.memory_space<vmem>>) target_semaphore(%47 : memref<!tpu.dma_semaphore, #tpu.memory_space<semaphore_mem>>)
    %48 = arith.index_cast %arg0 : i32 to index
    %c6 = arith.constant 6 : index
    %49 = memref.load %arg1[%48, %c6] : memref<2x26xi32, #tpu.memory_space<smem>>
    %c0_i32_28 = arith.constant 0 : i32
    %c511_i32_29 = arith.constant 511 : i32
    %50 = arith.maxsi %c0_i32_28, %49 : i32
    %51 = arith.minsi %c511_i32_29, %50 : i32
    %c0_i32_30 = arith.constant 0 : i32
    %c0_i32_31 = arith.constant 0 : i32
    %52 = tpu.memref_slice %arg3[%51, %c0_i32_31] : memref<512x768xf32, #tpu.memory_space<any>> -> memref<1x768xf32, #tpu.memory_space<any>>
    %c0_i32_32 = arith.constant 0 : i32
    %c0_i32_33 = arith.constant 0 : i32
    %53 = tpu.memref_slice %arg5[%c0_i32_32, %c0_i32_33] : memref<24x768xf32, #tpu.memory_space<vmem>> -> memref<1x768xf32, #tpu.memory_space<vmem>>
    %54 = tpu.memref_slice %arg6[%c0_i32_30] : memref<24x!tpu.dma_semaphore, #tpu.memory_space<semaphore_mem>> -> memref<1x!tpu.dma_semaphore, #tpu.memory_space<semaphore_mem>>
    %55 = tpu.memref_squeeze %54 : memref<1x!tpu.dma_semaphore, #tpu.memory_space<semaphore_mem>> -> memref<!tpu.dma_semaphore, #tpu.memory_space<semaphore_mem>>
    tpu.enqueue_dma source(%52 : memref<1x768xf32, #tpu.memory_space<any>>) target(%53 : memref<1x768xf32, #tpu.memory_space<vmem>>) target_semaphore(%55 : memref<!tpu.dma_semaphore, #tpu.memory_space<semaphore_mem>>)
    %56 = arith.index_cast %arg0 : i32 to index
    %c7 = arith.constant 7 : index
    %57 = memref.load %arg1[%56, %c7] : memref<2x26xi32, #tpu.memory_space<smem>>
    %c0_i32_34 = arith.constant 0 : i32
    %c511_i32_35 = arith.constant 511 : i32
    %58 = arith.maxsi %c0_i32_34, %57 : i32
    %59 = arith.minsi %c511_i32_35, %58 : i32
    %c1_i32 = arith.constant 1 : i32
    %c0_i32_36 = arith.constant 0 : i32
    %60 = tpu.memref_slice %arg3[%59, %c0_i32_36] : memref<512x768xf32, #tpu.memory_space<any>> -> memref<1x768xf32, #tpu.memory_space<any>>
    %c1_i32_37 = arith.constant 1 : i32
    %c0_i32_38 = arith.constant 0 : i32
    %61 = tpu.memref_slice %arg5[%c1_i32_37, %c0_i32_38] : memref<24x768xf32, #tpu.memory_space<vmem>> -> memref<1x768xf32, #tpu.memory_space<vmem>>
    %62 = tpu.memref_slice %arg6[%c1_i32] : memref<24x!tpu.dma_semaphore, #tpu.memory_space<semaphore_mem>> -> memref<1x!tpu.dma_semaphore, #tpu.memory_space<semaphore_mem>>
    %63 = tpu.memref_squeeze %62 : memref<1x!tpu.dma_semaphore, #tpu.memory_space<semaphore_mem>> -> memref<!tpu.dma_semaphore, #tpu.memory_space<semaphore_mem>>
    tpu.enqueue_dma source(%60 : memref<1x768xf32, #tpu.memory_space<any>>) target(%61 : memref<1x768xf32, #tpu.memory_space<vmem>>) target_semaphore(%63 : memref<!tpu.dma_semaphore, #tpu.memory_space<semaphore_mem>>)
    %64 = arith.index_cast %arg0 : i32 to index
    %c8 = arith.constant 8 : index
    %65 = memref.load %arg1[%64, %c8] : memref<2x26xi32, #tpu.memory_space<smem>>
    %c0_i32_39 = arith.constant 0 : i32
    %c511_i32_40 = arith.constant 511 : i32
    %66 = arith.maxsi %c0_i32_39, %65 : i32
    %67 = arith.minsi %c511_i32_40, %66 : i32
    %c2_i32 = arith.constant 2 : i32
    %c0_i32_41 = arith.constant 0 : i32
    %68 = tpu.memref_slice %arg3[%67, %c0_i32_41] : memref<512x768xf32, #tpu.memory_space<any>> -> memref<1x768xf32, #tpu.memory_space<any>>
    %c2_i32_42 = arith.constant 2 : i32
    %c0_i32_43 = arith.constant 0 : i32
    %69 = tpu.memref_slice %arg5[%c2_i32_42, %c0_i32_43] : memref<24x768xf32, #tpu.memory_space<vmem>> -> memref<1x768xf32, #tpu.memory_space<vmem>>
    %70 = tpu.memref_slice %arg6[%c2_i32] : memref<24x!tpu.dma_semaphore, #tpu.memory_space<semaphore_mem>> -> memref<1x!tpu.dma_semaphore, #tpu.memory_space<semaphore_mem>>
    %71 = tpu.memref_squeeze %70 : memref<1x!tpu.dma_semaphore, #tpu.memory_space<semaphore_mem>> -> memref<!tpu.dma_semaphore, #tpu.memory_space<semaphore_mem>>
    tpu.enqueue_dma source(%68 : memref<1x768xf32, #tpu.memory_space<any>>) target(%69 : memref<1x768xf32, #tpu.memory_space<vmem>>) target_semaphore(%71 : memref<!tpu.dma_semaphore, #tpu.memory_space<semaphore_mem>>)
    %72 = arith.index_cast %arg0 : i32 to index
    %c9 = arith.constant 9 : index
    %73 = memref.load %arg1[%72, %c9] : memref<2x26xi32, #tpu.memory_space<smem>>
    %c0_i32_44 = arith.constant 0 : i32
    %c511_i32_45 = arith.constant 511 : i32
    %74 = arith.maxsi %c0_i32_44, %73 : i32
    %75 = arith.minsi %c511_i32_45, %74 : i32
    %c3_i32 = arith.constant 3 : i32
    %c0_i32_46 = arith.constant 0 : i32
    %76 = tpu.memref_slice %arg3[%75, %c0_i32_46] : memref<512x768xf32, #tpu.memory_space<any>> -> memref<1x768xf32, #tpu.memory_space<any>>
    %c3_i32_47 = arith.constant 3 : i32
    %c0_i32_48 = arith.constant 0 : i32
    %77 = tpu.memref_slice %arg5[%c3_i32_47, %c0_i32_48] : memref<24x768xf32, #tpu.memory_space<vmem>> -> memref<1x768xf32, #tpu.memory_space<vmem>>
    %78 = tpu.memref_slice %arg6[%c3_i32] : memref<24x!tpu.dma_semaphore, #tpu.memory_space<semaphore_mem>> -> memref<1x!tpu.dma_semaphore, #tpu.memory_space<semaphore_mem>>
    %79 = tpu.memref_squeeze %78 : memref<1x!tpu.dma_semaphore, #tpu.memory_space<semaphore_mem>> -> memref<!tpu.dma_semaphore, #tpu.memory_space<semaphore_mem>>
    tpu.enqueue_dma source(%76 : memref<1x768xf32, #tpu.memory_space<any>>) target(%77 : memref<1x768xf32, #tpu.memory_space<vmem>>) target_semaphore(%79 : memref<!tpu.dma_semaphore, #tpu.memory_space<semaphore_mem>>)
    %80 = arith.index_cast %arg0 : i32 to index
    %c10 = arith.constant 10 : index
    %81 = memref.load %arg1[%80, %c10] : memref<2x26xi32, #tpu.memory_space<smem>>
    %c0_i32_49 = arith.constant 0 : i32
    %c511_i32_50 = arith.constant 511 : i32
    %82 = arith.maxsi %c0_i32_49, %81 : i32
    %83 = arith.minsi %c511_i32_50, %82 : i32
    %c4_i32 = arith.constant 4 : i32
    %c0_i32_51 = arith.constant 0 : i32
    %84 = tpu.memref_slice %arg3[%83, %c0_i32_51] : memref<512x768xf32, #tpu.memory_space<any>> -> memref<1x768xf32, #tpu.memory_space<any>>
    %c4_i32_52 = arith.constant 4 : i32
    %c0_i32_53 = arith.constant 0 : i32
    %85 = tpu.memref_slice %arg5[%c4_i32_52, %c0_i32_53] : memref<24x768xf32, #tpu.memory_space<vmem>> -> memref<1x768xf32, #tpu.memory_space<vmem>>
    %86 = tpu.memref_slice %arg6[%c4_i32] : memref<24x!tpu.dma_semaphore, #tpu.memory_space<semaphore_mem>> -> memref<1x!tpu.dma_semaphore, #tpu.memory_space<semaphore_mem>>
    %87 = tpu.memref_squeeze %86 : memref<1x!tpu.dma_semaphore, #tpu.memory_space<semaphore_mem>> -> memref<!tpu.dma_semaphore, #tpu.memory_space<semaphore_mem>>
    tpu.enqueue_dma source(%84 : memref<1x768xf32, #tpu.memory_space<any>>) target(%85 : memref<1x768xf32, #tpu.memory_space<vmem>>) target_semaphore(%87 : memref<!tpu.dma_semaphore, #tpu.memory_space<semaphore_mem>>)
    %88 = arith.index_cast %arg0 : i32 to index
    %c11 = arith.constant 11 : index
    %89 = memref.load %arg1[%88, %c11] : memref<2x26xi32, #tpu.memory_space<smem>>
    %c0_i32_54 = arith.constant 0 : i32
    %c511_i32_55 = arith.constant 511 : i32
    %90 = arith.maxsi %c0_i32_54, %89 : i32
    %91 = arith.minsi %c511_i32_55, %90 : i32
    %c5_i32 = arith.constant 5 : i32
    %c0_i32_56 = arith.constant 0 : i32
    %92 = tpu.memref_slice %arg3[%91, %c0_i32_56] : memref<512x768xf32, #tpu.memory_space<any>> -> memref<1x768xf32, #tpu.memory_space<any>>
    %c5_i32_57 = arith.constant 5 : i32
    %c0_i32_58 = arith.constant 0 : i32
    %93 = tpu.memref_slice %arg5[%c5_i32_57, %c0_i32_58] : memref<24x768xf32, #tpu.memory_space<vmem>> -> memref<1x768xf32, #tpu.memory_space<vmem>>
    %94 = tpu.memref_slice %arg6[%c5_i32] : memref<24x!tpu.dma_semaphore, #tpu.memory_space<semaphore_mem>> -> memref<1x!tpu.dma_semaphore, #tpu.memory_space<semaphore_mem>>
    %95 = tpu.memref_squeeze %94 : memref<1x!tpu.dma_semaphore, #tpu.memory_space<semaphore_mem>> -> memref<!tpu.dma_semaphore, #tpu.memory_space<semaphore_mem>>
    tpu.enqueue_dma source(%92 : memref<1x768xf32, #tpu.memory_space<any>>) target(%93 : memref<1x768xf32, #tpu.memory_space<vmem>>) target_semaphore(%95 : memref<!tpu.dma_semaphore, #tpu.memory_space<semaphore_mem>>)
    %96 = arith.index_cast %arg0 : i32 to index
    %c12 = arith.constant 12 : index
    %97 = memref.load %arg1[%96, %c12] : memref<2x26xi32, #tpu.memory_space<smem>>
    %c0_i32_59 = arith.constant 0 : i32
    %c511_i32_60 = arith.constant 511 : i32
    %98 = arith.maxsi %c0_i32_59, %97 : i32
    %99 = arith.minsi %c511_i32_60, %98 : i32
    %c6_i32 = arith.constant 6 : i32
    %c0_i32_61 = arith.constant 0 : i32
    %100 = tpu.memref_slice %arg3[%99, %c0_i32_61] : memref<512x768xf32, #tpu.memory_space<any>> -> memref<1x768xf32, #tpu.memory_space<any>>
    %c6_i32_62 = arith.constant 6 : i32
    %c0_i32_63 = arith.constant 0 : i32
    %101 = tpu.memref_slice %arg5[%c6_i32_62, %c0_i32_63] : memref<24x768xf32, #tpu.memory_space<vmem>> -> memref<1x768xf32, #tpu.memory_space<vmem>>
    %102 = tpu.memref_slice %arg6[%c6_i32] : memref<24x!tpu.dma_semaphore, #tpu.memory_space<semaphore_mem>> -> memref<1x!tpu.dma_semaphore, #tpu.memory_space<semaphore_mem>>
    %103 = tpu.memref_squeeze %102 : memref<1x!tpu.dma_semaphore, #tpu.memory_space<semaphore_mem>> -> memref<!tpu.dma_semaphore, #tpu.memory_space<semaphore_mem>>
    tpu.enqueue_dma source(%100 : memref<1x768xf32, #tpu.memory_space<any>>) target(%101 : memref<1x768xf32, #tpu.memory_space<vmem>>) target_semaphore(%103 : memref<!tpu.dma_semaphore, #tpu.memory_space<semaphore_mem>>)
    %104 = arith.index_cast %arg0 : i32 to index
    %c13 = arith.constant 13 : index
    %105 = memref.load %arg1[%104, %c13] : memref<2x26xi32, #tpu.memory_space<smem>>
    %c0_i32_64 = arith.constant 0 : i32
    %c511_i32_65 = arith.constant 511 : i32
    %106 = arith.maxsi %c0_i32_64, %105 : i32
    %107 = arith.minsi %c511_i32_65, %106 : i32
    %c7_i32 = arith.constant 7 : i32
    %c0_i32_66 = arith.constant 0 : i32
    %108 = tpu.memref_slice %arg3[%107, %c0_i32_66] : memref<512x768xf32, #tpu.memory_space<any>> -> memref<1x768xf32, #tpu.memory_space<any>>
    %c7_i32_67 = arith.constant 7 : i32
    %c0_i32_68 = arith.constant 0 : i32
    %109 = tpu.memref_slice %arg5[%c7_i32_67, %c0_i32_68] : memref<24x768xf32, #tpu.memory_space<vmem>> -> memref<1x768xf32, #tpu.memory_space<vmem>>
    %110 = tpu.memref_slice %arg6[%c7_i32] : memref<24x!tpu.dma_semaphore, #tpu.memory_space<semaphore_mem>> -> memref<1x!tpu.dma_semaphore, #tpu.memory_space<semaphore_mem>>
    %111 = tpu.memref_squeeze %110 : memref<1x!tpu.dma_semaphore, #tpu.memory_space<semaphore_mem>> -> memref<!tpu.dma_semaphore, #tpu.memory_space<semaphore_mem>>
    tpu.enqueue_dma source(%108 : memref<1x768xf32, #tpu.memory_space<any>>) target(%109 : memref<1x768xf32, #tpu.memory_space<vmem>>) target_semaphore(%111 : memref<!tpu.dma_semaphore, #tpu.memory_space<semaphore_mem>>)
    %c0_69 = arith.constant 0 : index
    %c0_70 = arith.constant 0 : index
    %112 = vector.load %arg2[%c0_69, %c0_70] : memref<50x768xf32, #tpu.memory_space<vmem>>, vector<50x768xf32>
    %c0_71 = arith.constant 0 : index
    %c0_72 = arith.constant 0 : index
    %c0_73 = arith.constant 0 : index
    %113 = vector.load %arg4[%c0_71, %c0_72, %c0_73] : memref<1x76x768xf32, #tpu.memory_space<vmem>>, vector<1x50x768xf32>
    %114 = vector.shape_cast %113 : vector<1x50x768xf32> to vector<50x768xf32>
    %115 = vector.shape_cast %112 : vector<50x768xf32> to vector<1x50x768xf32>
    tpu.vector_store %arg4[%c0_71, %c0_72, %c0_73], %115 {strides = array<i32>} : memref<1x76x768xf32, #tpu.memory_space<vmem>>, vector<1x50x768xf32>,
    %c16_i32_74 = arith.constant 16 : i32
    %c0_i32_75 = arith.constant 0 : i32
    %c0_i32_76 = arith.constant 0 : i32
    %116 = tpu.memref_slice %arg3[%c0_i32_75, %c0_i32_76] : memref<512x768xf32, #tpu.memory_space<any>> -> memref<1x768xf32, #tpu.memory_space<any>>
    %c16_i32_77 = arith.constant 16 : i32
    %c0_i32_78 = arith.constant 0 : i32
    %117 = tpu.memref_slice %arg5[%c16_i32_77, %c0_i32_78] : memref<24x768xf32, #tpu.memory_space<vmem>> -> memref<1x768xf32, #tpu.memory_space<vmem>>
    %118 = tpu.memref_slice %arg6[%c16_i32_74] : memref<24x!tpu.dma_semaphore, #tpu.memory_space<semaphore_mem>> -> memref<1x!tpu.dma_semaphore, #tpu.memory_space<semaphore_mem>>
    %119 = tpu.memref_squeeze %118 : memref<1x!tpu.dma_semaphore, #tpu.memory_space<semaphore_mem>> -> memref<!tpu.dma_semaphore, #tpu.memory_space<semaphore_mem>>
    tpu.wait_dma2 semaphore(%119 : memref<!tpu.dma_semaphore, #tpu.memory_space<semaphore_mem>>) src(%116 : memref<1x768xf32, #tpu.memory_space<any>>) dst(%117 : memref<1x768xf32, #tpu.memory_space<vmem>>)
    %c17_i32_79 = arith.constant 17 : i32
    %c0_i32_80 = arith.constant 0 : i32
    %c0_i32_81 = arith.constant 0 : i32
    %120 = tpu.memref_slice %arg3[%c0_i32_80, %c0_i32_81] : memref<512x768xf32, #tpu.memory_space<any>> -> memref<1x768xf32, #tpu.memory_space<any>>
    %c17_i32_82 = arith.constant 17 : i32
    %c0_i32_83 = arith.constant 0 : i32
    %121 = tpu.memref_slice %arg5[%c17_i32_82, %c0_i32_83] : memref<24x768xf32, #tpu.memory_space<vmem>> -> memref<1x768xf32, #tpu.memory_space<vmem>>
    %122 = tpu.memref_slice %arg6[%c17_i32_79] : memref<24x!tpu.dma_semaphore, #tpu.memory_space<semaphore_mem>> -> memref<1x!tpu.dma_semaphore, #tpu.memory_space<semaphore_mem>>
    %123 = tpu.memref_squeeze %122 : memref<1x!tpu.dma_semaphore, #tpu.memory_space<semaphore_mem>> -> memref<!tpu.dma_semaphore, #tpu.memory_space<semaphore_mem>>
    tpu.wait_dma2 semaphore(%123 : memref<!tpu.dma_semaphore, #tpu.memory_space<semaphore_mem>>) src(%120 : memref<1x768xf32, #tpu.memory_space<any>>) dst(%121 : memref<1x768xf32, #tpu.memory_space<vmem>>)
    %c18_i32_84 = arith.constant 18 : i32
    %c0_i32_85 = arith.constant 0 : i32
    %c0_i32_86 = arith.constant 0 : i32
    %124 = tpu.memref_slice %arg3[%c0_i32_85, %c0_i32_86] : memref<512x768xf32, #tpu.memory_space<any>> -> memref<1x768xf32, #tpu.memory_space<any>>
    %c18_i32_87 = arith.constant 18 : i32
    %c0_i32_88 = arith.constant 0 : i32
    %125 = tpu.memref_slice %arg5[%c18_i32_87, %c0_i32_88] : memref<24x768xf32, #tpu.memory_space<vmem>> -> memref<1x768xf32, #tpu.memory_space<vmem>>
    %126 = tpu.memref_slice %arg6[%c18_i32_84] : memref<24x!tpu.dma_semaphore, #tpu.memory_space<semaphore_mem>> -> memref<1x!tpu.dma_semaphore, #tpu.memory_space<semaphore_mem>>
    %127 = tpu.memref_squeeze %126 : memref<1x!tpu.dma_semaphore, #tpu.memory_space<semaphore_mem>> -> memref<!tpu.dma_semaphore, #tpu.memory_space<semaphore_mem>>
    tpu.wait_dma2 semaphore(%127 : memref<!tpu.dma_semaphore, #tpu.memory_space<semaphore_mem>>) src(%124 : memref<1x768xf32, #tpu.memory_space<any>>) dst(%125 : memref<1x768xf32, #tpu.memory_space<vmem>>)
    %c19_i32_89 = arith.constant 19 : i32
    %c0_i32_90 = arith.constant 0 : i32
    %c0_i32_91 = arith.constant 0 : i32
    %128 = tpu.memref_slice %arg3[%c0_i32_90, %c0_i32_91] : memref<512x768xf32, #tpu.memory_space<any>> -> memref<1x768xf32, #tpu.memory_space<any>>
    %c19_i32_92 = arith.constant 19 : i32
    %c0_i32_93 = arith.constant 0 : i32
    %129 = tpu.memref_slice %arg5[%c19_i32_92, %c0_i32_93] : memref<24x768xf32, #tpu.memory_space<vmem>> -> memref<1x768xf32, #tpu.memory_space<vmem>>
    %130 = tpu.memref_slice %arg6[%c19_i32_89] : memref<24x!tpu.dma_semaphore, #tpu.memory_space<semaphore_mem>> -> memref<1x!tpu.dma_semaphore, #tpu.memory_space<semaphore_mem>>
    %131 = tpu.memref_squeeze %130 : memref<1x!tpu.dma_semaphore, #tpu.memory_space<semaphore_mem>> -> memref<!tpu.dma_semaphore, #tpu.memory_space<semaphore_mem>>
    tpu.wait_dma2 semaphore(%131 : memref<!tpu.dma_semaphore, #tpu.memory_space<semaphore_mem>>) src(%128 : memref<1x768xf32, #tpu.memory_space<any>>) dst(%129 : memref<1x768xf32, #tpu.memory_space<vmem>>)
    %c20_i32_94 = arith.constant 20 : i32
    %c0_i32_95 = arith.constant 0 : i32
    %c0_i32_96 = arith.constant 0 : i32
    %132 = tpu.memref_slice %arg3[%c0_i32_95, %c0_i32_96] : memref<512x768xf32, #tpu.memory_space<any>> -> memref<1x768xf32, #tpu.memory_space<any>>
    %c20_i32_97 = arith.constant 20 : i32
    %c0_i32_98 = arith.constant 0 : i32
    %133 = tpu.memref_slice %arg5[%c20_i32_97, %c0_i32_98] : memref<24x768xf32, #tpu.memory_space<vmem>> -> memref<1x768xf32, #tpu.memory_space<vmem>>
    %134 = tpu.memref_slice %arg6[%c20_i32_94] : memref<24x!tpu.dma_semaphore, #tpu.memory_space<semaphore_mem>> -> memref<1x!tpu.dma_semaphore, #tpu.memory_space<semaphore_mem>>
    %135 = tpu.memref_squeeze %134 : memref<1x!tpu.dma_semaphore, #tpu.memory_space<semaphore_mem>> -> memref<!tpu.dma_semaphore, #tpu.memory_space<semaphore_mem>>
    tpu.wait_dma2 semaphore(%135 : memref<!tpu.dma_semaphore, #tpu.memory_space<semaphore_mem>>) src(%132 : memref<1x768xf32, #tpu.memory_space<any>>) dst(%133 : memref<1x768xf32, #tpu.memory_space<vmem>>)
    %c21_i32_99 = arith.constant 21 : i32
    %c0_i32_100 = arith.constant 0 : i32
    %c0_i32_101 = arith.constant 0 : i32
    %136 = tpu.memref_slice %arg3[%c0_i32_100, %c0_i32_101] : memref<512x768xf32, #tpu.memory_space<any>> -> memref<1x768xf32, #tpu.memory_space<any>>
    %c21_i32_102 = arith.constant 21 : i32
    %c0_i32_103 = arith.constant 0 : i32
    %137 = tpu.memref_slice %arg5[%c21_i32_102, %c0_i32_103] : memref<24x768xf32, #tpu.memory_space<vmem>> -> memref<1x768xf32, #tpu.memory_space<vmem>>
    %138 = tpu.memref_slice %arg6[%c21_i32_99] : memref<24x!tpu.dma_semaphore, #tpu.memory_space<semaphore_mem>> -> memref<1x!tpu.dma_semaphore, #tpu.memory_space<semaphore_mem>>
    %139 = tpu.memref_squeeze %138 : memref<1x!tpu.dma_semaphore, #tpu.memory_space<semaphore_mem>> -> memref<!tpu.dma_semaphore, #tpu.memory_space<semaphore_mem>>
    tpu.wait_dma2 semaphore(%139 : memref<!tpu.dma_semaphore, #tpu.memory_space<semaphore_mem>>) src(%136 : memref<1x768xf32, #tpu.memory_space<any>>) dst(%137 : memref<1x768xf32, #tpu.memory_space<vmem>>)
    %c16 = arith.constant 16 : index
    %c0_104 = arith.constant 0 : index
    %140 = vector.load %arg5[%c16, %c0_104] : memref<24x768xf32, #tpu.memory_space<vmem>>, vector<6x768xf32>
    %c0_105 = arith.constant 0 : index
    %c50 = arith.constant 50 : index
    %c0_106 = arith.constant 0 : index
    %141 = vector.load %arg4[%c0_105, %c50, %c0_106] : memref<1x76x768xf32, #tpu.memory_space<vmem>>, vector<1x6x768xf32>
    %142 = vector.shape_cast %141 : vector<1x6x768xf32> to vector<6x768xf32>
    %143 = vector.shape_cast %140 : vector<6x768xf32> to vector<1x6x768xf32>
    tpu.vector_store %arg4[%c0_105, %c50, %c0_106], %143 {strides = array<i32>} : memref<1x76x768xf32, #tpu.memory_space<vmem>>, vector<1x6x768xf32>,
    %c0_i32_107 = arith.constant 0 : i32
    %c2_i32_108 = arith.constant 2 : i32
    %144 = arith.addi %c0_i32_107, %c2_i32_108 : i32
    %c1_i32_109 = arith.constant 1 : i32
    scf.for %arg7 = %c0_i32_107 to %144 step %c1_i32_109  : i32 {
      %c1_i32_159 = arith.constant 1 : i32
      %197 = arith.muli %arg7, %c1_i32_159 : i32
      %c0_i32_160 = arith.constant 0 : i32
      %198 = arith.addi %c0_i32_160, %197 : i32
      %c2_i32_161 = arith.constant 2 : i32
      %c0_i32_162 = arith.constant 0 : i32
      %199 = arith.cmpi eq, %c2_i32_161, %c0_i32_162 : i32
      %c1_i32_163 = arith.constant 1 : i32
      %200 = arith.select %199, %c1_i32_163, %c2_i32_161 : i32
      %201 = arith.remsi %198, %200 : i32
      %c0_i32_164 = arith.constant 0 : i32
      %202 = arith.cmpi ne, %201, %c0_i32_164 : i32
      %c0_i32_165 = arith.constant 0 : i32
      %203 = arith.cmpi slt, %201, %c0_i32_165 : i32
      %c0_i32_166 = arith.constant 0 : i32
      %204 = arith.cmpi slt, %200, %c0_i32_166 : i32
      %205 = arith.xori %203, %204 : i1
      %206 = arith.andi %205, %202 : i1
      %207 = arith.addi %201, %200 : i32
      %208 = arith.select %206, %207, %201 : i32
      %c1_i32_167 = arith.constant 1 : i32
      %209 = arith.addi %198, %c1_i32_167 : i32
      %c2_i32_168 = arith.constant 2 : i32
      %210 = arith.cmpi slt, %209, %c2_i32_168 : i32
      %211 = arith.extui %210 : i1 to i32
      %c0_i32_169 = arith.constant 0 : i32
      %212 = arith.cmpi ne, %211, %c0_i32_169 : i32
      scf.if %212 {
        %c1_i32_214 = arith.constant 1 : i32
        %272 = arith.addi %198, %c1_i32_214 : i32
        %c1_i32_215 = arith.constant 1 : i32
        %273 = arith.subi %c1_i32_215, %208 : i32
        %c8_i32_216 = arith.constant 8 : i32
        %274 = arith.muli %272, %c8_i32_216 : i32
        %c6_i32_217 = arith.constant 6 : i32
        %275 = arith.addi %c6_i32_217, %274 : i32
        %c0_i32_218 = arith.constant 0 : i32
        %276 = arith.addi %275, %c0_i32_218 : i32
        %c8_i32_219 = arith.constant 8 : i32
        %277 = arith.muli %273, %c8_i32_219 : i32
        %c0_i32_220 = arith.constant 0 : i32
        %278 = arith.addi %277, %c0_i32_220 : i32
        %279 = arith.index_cast %arg0 : i32 to index
        %280 = arith.index_cast %276 : i32 to index
        %281 = memref.load %arg1[%279, %280] : memref<2x26xi32, #tpu.memory_space<smem>>
        %c0_i32_221 = arith.constant 0 : i32
        %c511_i32_222 = arith.constant 511 : i32
        %282 = arith.maxsi %c0_i32_221, %281 : i32
        %283 = arith.minsi %c511_i32_222, %282 : i32
        %c0_i32_223 = arith.constant 0 : i32
        %284 = tpu.memref_slice %arg3[%283, %c0_i32_223] : memref<512x768xf32, #tpu.memory_space<any>> -> memref<1x768xf32, #tpu.memory_space<any>>
        %c0_i32_224 = arith.constant 0 : i32
        %285 = tpu.memref_slice %arg5[%278, %c0_i32_224] : memref<24x768xf32, #tpu.memory_space<vmem>> -> memref<1x768xf32, #tpu.memory_space<vmem>>
        %286 = tpu.memref_slice %arg6[%278] : memref<24x!tpu.dma_semaphore, #tpu.memory_space<semaphore_mem>> -> memref<1x!tpu.dma_semaphore, #tpu.memory_space<semaphore_mem>>
        %287 = tpu.memref_squeeze %286 : memref<1x!tpu.dma_semaphore, #tpu.memory_space<semaphore_mem>> -> memref<!tpu.dma_semaphore, #tpu.memory_space<semaphore_mem>>
        tpu.enqueue_dma source(%284 : memref<1x768xf32, #tpu.memory_space<any>>) target(%285 : memref<1x768xf32, #tpu.memory_space<vmem>>) target_semaphore(%287 : memref<!tpu.dma_semaphore, #tpu.memory_space<semaphore_mem>>)
        %c1_i32_225 = arith.constant 1 : i32
        %288 = arith.addi %275, %c1_i32_225 : i32
        %c8_i32_226 = arith.constant 8 : i32
        %289 = arith.muli %273, %c8_i32_226 : i32
        %c1_i32_227 = arith.constant 1 : i32
        %290 = arith.addi %289, %c1_i32_227 : i32
        %291 = arith.index_cast %arg0 : i32 to index
        %292 = arith.index_cast %288 : i32 to index
        %293 = memref.load %arg1[%291, %292] : memref<2x26xi32, #tpu.memory_space<smem>>
        %c0_i32_228 = arith.constant 0 : i32
        %c511_i32_229 = arith.constant 511 : i32
        %294 = arith.maxsi %c0_i32_228, %293 : i32
        %295 = arith.minsi %c511_i32_229, %294 : i32
        %c0_i32_230 = arith.constant 0 : i32
        %296 = tpu.memref_slice %arg3[%295, %c0_i32_230] : memref<512x768xf32, #tpu.memory_space<any>> -> memref<1x768xf32, #tpu.memory_space<any>>
        %c0_i32_231 = arith.constant 0 : i32
        %297 = tpu.memref_slice %arg5[%290, %c0_i32_231] : memref<24x768xf32, #tpu.memory_space<vmem>> -> memref<1x768xf32, #tpu.memory_space<vmem>>
        %298 = tpu.memref_slice %arg6[%290] : memref<24x!tpu.dma_semaphore, #tpu.memory_space<semaphore_mem>> -> memref<1x!tpu.dma_semaphore, #tpu.memory_space<semaphore_mem>>
        %299 = tpu.memref_squeeze %298 : memref<1x!tpu.dma_semaphore, #tpu.memory_space<semaphore_mem>> -> memref<!tpu.dma_semaphore, #tpu.memory_space<semaphore_mem>>
        tpu.enqueue_dma source(%296 : memref<1x768xf32, #tpu.memory_space<any>>) target(%297 : memref<1x768xf32, #tpu.memory_space<vmem>>) target_semaphore(%299 : memref<!tpu.dma_semaphore, #tpu.memory_space<semaphore_mem>>)
        %c2_i32_232 = arith.constant 2 : i32
        %300 = arith.addi %275, %c2_i32_232 : i32
        %c8_i32_233 = arith.constant 8 : i32
        %301 = arith.muli %273, %c8_i32_233 : i32
        %c2_i32_234 = arith.constant 2 : i32
        %302 = arith.addi %301, %c2_i32_234 : i32
        %303 = arith.index_cast %arg0 : i32 to index
        %304 = arith.index_cast %300 : i32 to index
        %305 = memref.load %arg1[%303, %304] : memref<2x26xi32, #tpu.memory_space<smem>>
        %c0_i32_235 = arith.constant 0 : i32
        %c511_i32_236 = arith.constant 511 : i32
        %306 = arith.maxsi %c0_i32_235, %305 : i32
        %307 = arith.minsi %c511_i32_236, %306 : i32
        %c0_i32_237 = arith.constant 0 : i32
        %308 = tpu.memref_slice %arg3[%307, %c0_i32_237] : memref<512x768xf32, #tpu.memory_space<any>> -> memref<1x768xf32, #tpu.memory_space<any>>
        %c0_i32_238 = arith.constant 0 : i32
        %309 = tpu.memref_slice %arg5[%302, %c0_i32_238] : memref<24x768xf32, #tpu.memory_space<vmem>> -> memref<1x768xf32, #tpu.memory_space<vmem>>
        %310 = tpu.memref_slice %arg6[%302] : memref<24x!tpu.dma_semaphore, #tpu.memory_space<semaphore_mem>> -> memref<1x!tpu.dma_semaphore, #tpu.memory_space<semaphore_mem>>
        %311 = tpu.memref_squeeze %310 : memref<1x!tpu.dma_semaphore, #tpu.memory_space<semaphore_mem>> -> memref<!tpu.dma_semaphore, #tpu.memory_space<semaphore_mem>>
        tpu.enqueue_dma source(%308 : memref<1x768xf32, #tpu.memory_space<any>>) target(%309 : memref<1x768xf32, #tpu.memory_space<vmem>>) target_semaphore(%311 : memref<!tpu.dma_semaphore, #tpu.memory_space<semaphore_mem>>)
        %c3_i32_239 = arith.constant 3 : i32
        %312 = arith.addi %275, %c3_i32_239 : i32
        %c8_i32_240 = arith.constant 8 : i32
        %313 = arith.muli %273, %c8_i32_240 : i32
        %c3_i32_241 = arith.constant 3 : i32
        %314 = arith.addi %313, %c3_i32_241 : i32
        %315 = arith.index_cast %arg0 : i32 to index
        %316 = arith.index_cast %312 : i32 to index
        %317 = memref.load %arg1[%315, %316] : memref<2x26xi32, #tpu.memory_space<smem>>
        %c0_i32_242 = arith.constant 0 : i32
        %c511_i32_243 = arith.constant 511 : i32
        %318 = arith.maxsi %c0_i32_242, %317 : i32
        %319 = arith.minsi %c511_i32_243, %318 : i32
        %c0_i32_244 = arith.constant 0 : i32
        %320 = tpu.memref_slice %arg3[%319, %c0_i32_244] : memref<512x768xf32, #tpu.memory_space<any>> -> memref<1x768xf32, #tpu.memory_space<any>>
        %c0_i32_245 = arith.constant 0 : i32
        %321 = tpu.memref_slice %arg5[%314, %c0_i32_245] : memref<24x768xf32, #tpu.memory_space<vmem>> -> memref<1x768xf32, #tpu.memory_space<vmem>>
        %322 = tpu.memref_slice %arg6[%314] : memref<24x!tpu.dma_semaphore, #tpu.memory_space<semaphore_mem>> -> memref<1x!tpu.dma_semaphore, #tpu.memory_space<semaphore_mem>>
        %323 = tpu.memref_squeeze %322 : memref<1x!tpu.dma_semaphore, #tpu.memory_space<semaphore_mem>> -> memref<!tpu.dma_semaphore, #tpu.memory_space<semaphore_mem>>
        tpu.enqueue_dma source(%320 : memref<1x768xf32, #tpu.memory_space<any>>) target(%321 : memref<1x768xf32, #tpu.memory_space<vmem>>) target_semaphore(%323 : memref<!tpu.dma_semaphore, #tpu.memory_space<semaphore_mem>>)
        %c4_i32_246 = arith.constant 4 : i32
        %324 = arith.addi %275, %c4_i32_246 : i32
        %c8_i32_247 = arith.constant 8 : i32
        %325 = arith.muli %273, %c8_i32_247 : i32
        %c4_i32_248 = arith.constant 4 : i32
        %326 = arith.addi %325, %c4_i32_248 : i32
        %327 = arith.index_cast %arg0 : i32 to index
        %328 = arith.index_cast %324 : i32 to index
        %329 = memref.load %arg1[%327, %328] : memref<2x26xi32, #tpu.memory_space<smem>>
        %c0_i32_249 = arith.constant 0 : i32
        %c511_i32_250 = arith.constant 511 : i32
        %330 = arith.maxsi %c0_i32_249, %329 : i32
        %331 = arith.minsi %c511_i32_250, %330 : i32
        %c0_i32_251 = arith.constant 0 : i32
        %332 = tpu.memref_slice %arg3[%331, %c0_i32_251] : memref<512x768xf32, #tpu.memory_space<any>> -> memref<1x768xf32, #tpu.memory_space<any>>
        %c0_i32_252 = arith.constant 0 : i32
        %333 = tpu.memref_slice %arg5[%326, %c0_i32_252] : memref<24x768xf32, #tpu.memory_space<vmem>> -> memref<1x768xf32, #tpu.memory_space<vmem>>
        %334 = tpu.memref_slice %arg6[%326] : memref<24x!tpu.dma_semaphore, #tpu.memory_space<semaphore_mem>> -> memref<1x!tpu.dma_semaphore, #tpu.memory_space<semaphore_mem>>
        %335 = tpu.memref_squeeze %334 : memref<1x!tpu.dma_semaphore, #tpu.memory_space<semaphore_mem>> -> memref<!tpu.dma_semaphore, #tpu.memory_space<semaphore_mem>>
        tpu.enqueue_dma source(%332 : memref<1x768xf32, #tpu.memory_space<any>>) target(%333 : memref<1x768xf32, #tpu.memory_space<vmem>>) target_semaphore(%335 : memref<!tpu.dma_semaphore, #tpu.memory_space<semaphore_mem>>)
        %c5_i32_253 = arith.constant 5 : i32
        %336 = arith.addi %275, %c5_i32_253 : i32
        %c8_i32_254 = arith.constant 8 : i32
        %337 = arith.muli %273, %c8_i32_254 : i32
        %c5_i32_255 = arith.constant 5 : i32
        %338 = arith.addi %337, %c5_i32_255 : i32
        %339 = arith.index_cast %arg0 : i32 to index
        %340 = arith.index_cast %336 : i32 to index
        %341 = memref.load %arg1[%339, %340] : memref<2x26xi32, #tpu.memory_space<smem>>
        %c0_i32_256 = arith.constant 0 : i32
        %c511_i32_257 = arith.constant 511 : i32
        %342 = arith.maxsi %c0_i32_256, %341 : i32
        %343 = arith.minsi %c511_i32_257, %342 : i32
        %c0_i32_258 = arith.constant 0 : i32
        %344 = tpu.memref_slice %arg3[%343, %c0_i32_258] : memref<512x768xf32, #tpu.memory_space<any>> -> memref<1x768xf32, #tpu.memory_space<any>>
        %c0_i32_259 = arith.constant 0 : i32
        %345 = tpu.memref_slice %arg5[%338, %c0_i32_259] : memref<24x768xf32, #tpu.memory_space<vmem>> -> memref<1x768xf32, #tpu.memory_space<vmem>>
        %346 = tpu.memref_slice %arg6[%338] : memref<24x!tpu.dma_semaphore, #tpu.memory_space<semaphore_mem>> -> memref<1x!tpu.dma_semaphore, #tpu.memory_space<semaphore_mem>>
        %347 = tpu.memref_squeeze %346 : memref<1x!tpu.dma_semaphore, #tpu.memory_space<semaphore_mem>> -> memref<!tpu.dma_semaphore, #tpu.memory_space<semaphore_mem>>
        tpu.enqueue_dma source(%344 : memref<1x768xf32, #tpu.memory_space<any>>) target(%345 : memref<1x768xf32, #tpu.memory_space<vmem>>) target_semaphore(%347 : memref<!tpu.dma_semaphore, #tpu.memory_space<semaphore_mem>>)
        %c6_i32_260 = arith.constant 6 : i32
        %348 = arith.addi %275, %c6_i32_260 : i32
        %c8_i32_261 = arith.constant 8 : i32
        %349 = arith.muli %273, %c8_i32_261 : i32
        %c6_i32_262 = arith.constant 6 : i32
        %350 = arith.addi %349, %c6_i32_262 : i32
        %351 = arith.index_cast %arg0 : i32 to index
        %352 = arith.index_cast %348 : i32 to index
        %353 = memref.load %arg1[%351, %352] : memref<2x26xi32, #tpu.memory_space<smem>>
        %c0_i32_263 = arith.constant 0 : i32
        %c511_i32_264 = arith.constant 511 : i32
        %354 = arith.maxsi %c0_i32_263, %353 : i32
        %355 = arith.minsi %c511_i32_264, %354 : i32
        %c0_i32_265 = arith.constant 0 : i32
        %356 = tpu.memref_slice %arg3[%355, %c0_i32_265] : memref<512x768xf32, #tpu.memory_space<any>> -> memref<1x768xf32, #tpu.memory_space<any>>
        %c0_i32_266 = arith.constant 0 : i32
        %357 = tpu.memref_slice %arg5[%350, %c0_i32_266] : memref<24x768xf32, #tpu.memory_space<vmem>> -> memref<1x768xf32, #tpu.memory_space<vmem>>
        %358 = tpu.memref_slice %arg6[%350] : memref<24x!tpu.dma_semaphore, #tpu.memory_space<semaphore_mem>> -> memref<1x!tpu.dma_semaphore, #tpu.memory_space<semaphore_mem>>
        %359 = tpu.memref_squeeze %358 : memref<1x!tpu.dma_semaphore, #tpu.memory_space<semaphore_mem>> -> memref<!tpu.dma_semaphore, #tpu.memory_space<semaphore_mem>>
        tpu.enqueue_dma source(%356 : memref<1x768xf32, #tpu.memory_space<any>>) target(%357 : memref<1x768xf32, #tpu.memory_space<vmem>>) target_semaphore(%359 : memref<!tpu.dma_semaphore, #tpu.memory_space<semaphore_mem>>)
        %c7_i32_267 = arith.constant 7 : i32
        %360 = arith.addi %275, %c7_i32_267 : i32
        %c8_i32_268 = arith.constant 8 : i32
        %361 = arith.muli %273, %c8_i32_268 : i32
        %c7_i32_269 = arith.constant 7 : i32
        %362 = arith.addi %361, %c7_i32_269 : i32
        %363 = arith.index_cast %arg0 : i32 to index
        %364 = arith.index_cast %360 : i32 to index
        %365 = memref.load %arg1[%363, %364] : memref<2x26xi32, #tpu.memory_space<smem>>
        %c0_i32_270 = arith.constant 0 : i32
        %c511_i32_271 = arith.constant 511 : i32
        %366 = arith.maxsi %c0_i32_270, %365 : i32
        %367 = arith.minsi %c511_i32_271, %366 : i32
        %c0_i32_272 = arith.constant 0 : i32
        %368 = tpu.memref_slice %arg3[%367, %c0_i32_272] : memref<512x768xf32, #tpu.memory_space<any>> -> memref<1x768xf32, #tpu.memory_space<any>>
        %c0_i32_273 = arith.constant 0 : i32
        %369 = tpu.memref_slice %arg5[%362, %c0_i32_273] : memref<24x768xf32, #tpu.memory_space<vmem>> -> memref<1x768xf32, #tpu.memory_space<vmem>>
        %370 = tpu.memref_slice %arg6[%362] : memref<24x!tpu.dma_semaphore, #tpu.memory_space<semaphore_mem>> -> memref<1x!tpu.dma_semaphore, #tpu.memory_space<semaphore_mem>>
        %371 = tpu.memref_squeeze %370 : memref<1x!tpu.dma_semaphore, #tpu.memory_space<semaphore_mem>> -> memref<!tpu.dma_semaphore, #tpu.memory_space<semaphore_mem>>
        tpu.enqueue_dma source(%368 : memref<1x768xf32, #tpu.memory_space<any>>) target(%369 : memref<1x768xf32, #tpu.memory_space<vmem>>) target_semaphore(%371 : memref<!tpu.dma_semaphore, #tpu.memory_space<semaphore_mem>>)
      } else {
      }
      %c8_i32 = arith.constant 8 : i32
      %213 = arith.muli %208, %c8_i32 : i32
      %c0_i32_170 = arith.constant 0 : i32
      %214 = arith.addi %213, %c0_i32_170 : i32
      %c0_i32_171 = arith.constant 0 : i32
      %c0_i32_172 = arith.constant 0 : i32
      %215 = tpu.memref_slice %arg3[%c0_i32_171, %c0_i32_172] : memref<512x768xf32, #tpu.memory_space<any>> -> memref<1x768xf32, #tpu.memory_space<any>>
      %c0_i32_173 = arith.constant 0 : i32
      %216 = tpu.memref_slice %arg5[%214, %c0_i32_173] : memref<24x768xf32, #tpu.memory_space<vmem>> -> memref<1x768xf32, #tpu.memory_space<vmem>>
      %217 = tpu.memref_slice %arg6[%214] : memref<24x!tpu.dma_semaphore, #tpu.memory_space<semaphore_mem>> -> memref<1x!tpu.dma_semaphore, #tpu.memory_space<semaphore_mem>>
      %218 = tpu.memref_squeeze %217 : memref<1x!tpu.dma_semaphore, #tpu.memory_space<semaphore_mem>> -> memref<!tpu.dma_semaphore, #tpu.memory_space<semaphore_mem>>
      tpu.wait_dma2 semaphore(%218 : memref<!tpu.dma_semaphore, #tpu.memory_space<semaphore_mem>>) src(%215 : memref<1x768xf32, #tpu.memory_space<any>>) dst(%216 : memref<1x768xf32, #tpu.memory_space<vmem>>)
      %c8_i32_174 = arith.constant 8 : i32
      %219 = arith.muli %208, %c8_i32_174 : i32
      %c1_i32_175 = arith.constant 1 : i32
      %220 = arith.addi %219, %c1_i32_175 : i32
      %c0_i32_176 = arith.constant 0 : i32
      %c0_i32_177 = arith.constant 0 : i32
      %221 = tpu.memref_slice %arg3[%c0_i32_176, %c0_i32_177] : memref<512x768xf32, #tpu.memory_space<any>> -> memref<1x768xf32, #tpu.memory_space<any>>
      %c0_i32_178 = arith.constant 0 : i32
      %222 = tpu.memref_slice %arg5[%220, %c0_i32_178] : memref<24x768xf32, #tpu.memory_space<vmem>> -> memref<1x768xf32, #tpu.memory_space<vmem>>
      %223 = tpu.memref_slice %arg6[%220] : memref<24x!tpu.dma_semaphore, #tpu.memory_space<semaphore_mem>> -> memref<1x!tpu.dma_semaphore, #tpu.memory_space<semaphore_mem>>
      %224 = tpu.memref_squeeze %223 : memref<1x!tpu.dma_semaphore, #tpu.memory_space<semaphore_mem>> -> memref<!tpu.dma_semaphore, #tpu.memory_space<semaphore_mem>>
      tpu.wait_dma2 semaphore(%224 : memref<!tpu.dma_semaphore, #tpu.memory_space<semaphore_mem>>) src(%221 : memref<1x768xf32, #tpu.memory_space<any>>) dst(%222 : memref<1x768xf32, #tpu.memory_space<vmem>>)
      %c8_i32_179 = arith.constant 8 : i32
      %225 = arith.muli %208, %c8_i32_179 : i32
      %c2_i32_180 = arith.constant 2 : i32
      %226 = arith.addi %225, %c2_i32_180 : i32
      %c0_i32_181 = arith.constant 0 : i32
      %c0_i32_182 = arith.constant 0 : i32
      %227 = tpu.memref_slice %arg3[%c0_i32_181, %c0_i32_182] : memref<512x768xf32, #tpu.memory_space<any>> -> memref<1x768xf32, #tpu.memory_space<any>>
      %c0_i32_183 = arith.constant 0 : i32
      %228 = tpu.memref_slice %arg5[%226, %c0_i32_183] : memref<24x768xf32, #tpu.memory_space<vmem>> -> memref<1x768xf32, #tpu.memory_space<vmem>>
      %229 = tpu.memref_slice %arg6[%226] : memref<24x!tpu.dma_semaphore, #tpu.memory_space<semaphore_mem>> -> memref<1x!tpu.dma_semaphore, #tpu.memory_space<semaphore_mem>>
      %230 = tpu.memref_squeeze %229 : memref<1x!tpu.dma_semaphore, #tpu.memory_space<semaphore_mem>> -> memref<!tpu.dma_semaphore, #tpu.memory_space<semaphore_mem>>
      tpu.wait_dma2 semaphore(%230 : memref<!tpu.dma_semaphore, #tpu.memory_space<semaphore_mem>>) src(%227 : memref<1x768xf32, #tpu.memory_space<any>>) dst(%228 : memref<1x768xf32, #tpu.memory_space<vmem>>)
      %c8_i32_184 = arith.constant 8 : i32
      %231 = arith.muli %208, %c8_i32_184 : i32
      %c3_i32_185 = arith.constant 3 : i32
      %232 = arith.addi %231, %c3_i32_185 : i32
      %c0_i32_186 = arith.constant 0 : i32
      %c0_i32_187 = arith.constant 0 : i32
      %233 = tpu.memref_slice %arg3[%c0_i32_186, %c0_i32_187] : memref<512x768xf32, #tpu.memory_space<any>> -> memref<1x768xf32, #tpu.memory_space<any>>
      %c0_i32_188 = arith.constant 0 : i32
      %234 = tpu.memref_slice %arg5[%232, %c0_i32_188] : memref<24x768xf32, #tpu.memory_space<vmem>> -> memref<1x768xf32, #tpu.memory_space<vmem>>
      %235 = tpu.memref_slice %arg6[%232] : memref<24x!tpu.dma_semaphore, #tpu.memory_space<semaphore_mem>> -> memref<1x!tpu.dma_semaphore, #tpu.memory_space<semaphore_mem>>
      %236 = tpu.memref_squeeze %235 : memref<1x!tpu.dma_semaphore, #tpu.memory_space<semaphore_mem>> -> memref<!tpu.dma_semaphore, #tpu.memory_space<semaphore_mem>>
      tpu.wait_dma2 semaphore(%236 : memref<!tpu.dma_semaphore, #tpu.memory_space<semaphore_mem>>) src(%233 : memref<1x768xf32, #tpu.memory_space<any>>) dst(%234 : memref<1x768xf32, #tpu.memory_space<vmem>>)
      %c8_i32_189 = arith.constant 8 : i32
      %237 = arith.muli %208, %c8_i32_189 : i32
      %c4_i32_190 = arith.constant 4 : i32
      %238 = arith.addi %237, %c4_i32_190 : i32
      %c0_i32_191 = arith.constant 0 : i32
      %c0_i32_192 = arith.constant 0 : i32
      %239 = tpu.memref_slice %arg3[%c0_i32_191, %c0_i32_192] : memref<512x768xf32, #tpu.memory_space<any>> -> memref<1x768xf32, #tpu.memory_space<any>>
      %c0_i32_193 = arith.constant 0 : i32
      %240 = tpu.memref_slice %arg5[%238, %c0_i32_193] : memref<24x768xf32, #tpu.memory_space<vmem>> -> memref<1x768xf32, #tpu.memory_space<vmem>>
      %241 = tpu.memref_slice %arg6[%238] : memref<24x!tpu.dma_semaphore, #tpu.memory_space<semaphore_mem>> -> memref<1x!tpu.dma_semaphore, #tpu.memory_space<semaphore_mem>>
      %242 = tpu.memref_squeeze %241 : memref<1x!tpu.dma_semaphore, #tpu.memory_space<semaphore_mem>> -> memref<!tpu.dma_semaphore, #tpu.memory_space<semaphore_mem>>
      tpu.wait_dma2 semaphore(%242 : memref<!tpu.dma_semaphore, #tpu.memory_space<semaphore_mem>>) src(%239 : memref<1x768xf32, #tpu.memory_space<any>>) dst(%240 : memref<1x768xf32, #tpu.memory_space<vmem>>)
      %c8_i32_194 = arith.constant 8 : i32
      %243 = arith.muli %208, %c8_i32_194 : i32
      %c5_i32_195 = arith.constant 5 : i32
      %244 = arith.addi %243, %c5_i32_195 : i32
      %c0_i32_196 = arith.constant 0 : i32
      %c0_i32_197 = arith.constant 0 : i32
      %245 = tpu.memref_slice %arg3[%c0_i32_196, %c0_i32_197] : memref<512x768xf32, #tpu.memory_space<any>> -> memref<1x768xf32, #tpu.memory_space<any>>
      %c0_i32_198 = arith.constant 0 : i32
      %246 = tpu.memref_slice %arg5[%244, %c0_i32_198] : memref<24x768xf32, #tpu.memory_space<vmem>> -> memref<1x768xf32, #tpu.memory_space<vmem>>
      %247 = tpu.memref_slice %arg6[%244] : memref<24x!tpu.dma_semaphore, #tpu.memory_space<semaphore_mem>> -> memref<1x!tpu.dma_semaphore, #tpu.memory_space<semaphore_mem>>
      %248 = tpu.memref_squeeze %247 : memref<1x!tpu.dma_semaphore, #tpu.memory_space<semaphore_mem>> -> memref<!tpu.dma_semaphore, #tpu.memory_space<semaphore_mem>>
      tpu.wait_dma2 semaphore(%248 : memref<!tpu.dma_semaphore, #tpu.memory_space<semaphore_mem>>) src(%245 : memref<1x768xf32, #tpu.memory_space<any>>) dst(%246 : memref<1x768xf32, #tpu.memory_space<vmem>>)
      %c8_i32_199 = arith.constant 8 : i32
      %249 = arith.muli %208, %c8_i32_199 : i32
      %c6_i32_200 = arith.constant 6 : i32
      %250 = arith.addi %249, %c6_i32_200 : i32
      %c0_i32_201 = arith.constant 0 : i32
      %c0_i32_202 = arith.constant 0 : i32
      %251 = tpu.memref_slice %arg3[%c0_i32_201, %c0_i32_202] : memref<512x768xf32, #tpu.memory_space<any>> -> memref<1x768xf32, #tpu.memory_space<any>>
      %c0_i32_203 = arith.constant 0 : i32
      %252 = tpu.memref_slice %arg5[%250, %c0_i32_203] : memref<24x768xf32, #tpu.memory_space<vmem>> -> memref<1x768xf32, #tpu.memory_space<vmem>>
      %253 = tpu.memref_slice %arg6[%250] : memref<24x!tpu.dma_semaphore, #tpu.memory_space<semaphore_mem>> -> memref<1x!tpu.dma_semaphore, #tpu.memory_space<semaphore_mem>>
      %254 = tpu.memref_squeeze %253 : memref<1x!tpu.dma_semaphore, #tpu.memory_space<semaphore_mem>> -> memref<!tpu.dma_semaphore, #tpu.memory_space<semaphore_mem>>
      tpu.wait_dma2 semaphore(%254 : memref<!tpu.dma_semaphore, #tpu.memory_space<semaphore_mem>>) src(%251 : memref<1x768xf32, #tpu.memory_space<any>>) dst(%252 : memref<1x768xf32, #tpu.memory_space<vmem>>)
      %c8_i32_204 = arith.constant 8 : i32
      %255 = arith.muli %208, %c8_i32_204 : i32
      %c7_i32_205 = arith.constant 7 : i32
      %256 = arith.addi %255, %c7_i32_205 : i32
      %c0_i32_206 = arith.constant 0 : i32
      %c0_i32_207 = arith.constant 0 : i32
      %257 = tpu.memref_slice %arg3[%c0_i32_206, %c0_i32_207] : memref<512x768xf32, #tpu.memory_space<any>> -> memref<1x768xf32, #tpu.memory_space<any>>
      %c0_i32_208 = arith.constant 0 : i32
      %258 = tpu.memref_slice %arg5[%256, %c0_i32_208] : memref<24x768xf32, #tpu.memory_space<vmem>> -> memref<1x768xf32, #tpu.memory_space<vmem>>
      %259 = tpu.memref_slice %arg6[%256] : memref<24x!tpu.dma_semaphore, #tpu.memory_space<semaphore_mem>> -> memref<1x!tpu.dma_semaphore, #tpu.memory_space<semaphore_mem>>
      %260 = tpu.memref_squeeze %259 : memref<1x!tpu.dma_semaphore, #tpu.memory_space<semaphore_mem>> -> memref<!tpu.dma_semaphore, #tpu.memory_space<semaphore_mem>>
      tpu.wait_dma2 semaphore(%260 : memref<!tpu.dma_semaphore, #tpu.memory_space<semaphore_mem>>) src(%257 : memref<1x768xf32, #tpu.memory_space<any>>) dst(%258 : memref<1x768xf32, #tpu.memory_space<vmem>>)
      %c8_i32_209 = arith.constant 8 : i32
      %261 = arith.muli %208, %c8_i32_209 : i32
      %262 = tpu.assume_multiple %261, 8 : i32
      %c8_i32_210 = arith.constant 8 : i32
      %263 = arith.muli %198, %c8_i32_210 : i32
      %c56_i32 = arith.constant 56 : i32
      %264 = arith.addi %c56_i32, %263 : i32
      %265 = tpu.assume_multiple %264, 8 : i32
      %266 = arith.index_cast %262 : i32 to index
      %c0_211 = arith.constant 0 : index
      %267 = vector.load %arg5[%266, %c0_211] : memref<24x768xf32, #tpu.memory_space<vmem>>, vector<8x768xf32>
      %c0_212 = arith.constant 0 : index
      %268 = arith.index_cast %265 : i32 to index
      %c0_213 = arith.constant 0 : index
      %269 = vector.load %arg4[%c0_212, %268, %c0_213] : memref<1x76x768xf32, #tpu.memory_space<vmem>>, vector<1x8x768xf32>
      %270 = vector.shape_cast %269 : vector<1x8x768xf32> to vector<8x768xf32>
      %271 = vector.shape_cast %267 : vector<8x768xf32> to vector<1x8x768xf32>
      tpu.vector_store %arg4[%c0_212, %268, %c0_213], %271 {strides = array<i32>} : memref<1x76x768xf32, #tpu.memory_space<vmem>>, vector<1x8x768xf32>,
    }
    %c2_i32_110 = arith.constant 2 : i32
    %145 = arith.index_cast %arg0 : i32 to index
    %c22 = arith.constant 22 : index
    %146 = memref.load %arg1[%145, %c22] : memref<2x26xi32, #tpu.memory_space<smem>>
    %c0_i32_111 = arith.constant 0 : i32
    %c511_i32_112 = arith.constant 511 : i32
    %147 = arith.maxsi %c0_i32_111, %146 : i32
    %148 = arith.minsi %c511_i32_112, %147 : i32
    %c16_i32_113 = arith.constant 16 : i32
    %c0_i32_114 = arith.constant 0 : i32
    %149 = tpu.memref_slice %arg3[%148, %c0_i32_114] : memref<512x768xf32, #tpu.memory_space<any>> -> memref<1x768xf32, #tpu.memory_space<any>>
    %c16_i32_115 = arith.constant 16 : i32
    %c0_i32_116 = arith.constant 0 : i32
    %150 = tpu.memref_slice %arg5[%c16_i32_115, %c0_i32_116] : memref<24x768xf32, #tpu.memory_space<vmem>> -> memref<1x768xf32, #tpu.memory_space<vmem>>
    %151 = tpu.memref_slice %arg6[%c16_i32_113] : memref<24x!tpu.dma_semaphore, #tpu.memory_space<semaphore_mem>> -> memref<1x!tpu.dma_semaphore, #tpu.memory_space<semaphore_mem>>
    %152 = tpu.memref_squeeze %151 : memref<1x!tpu.dma_semaphore, #tpu.memory_space<semaphore_mem>> -> memref<!tpu.dma_semaphore, #tpu.memory_space<semaphore_mem>>
    tpu.enqueue_dma source(%149 : memref<1x768xf32, #tpu.memory_space<any>>) target(%150 : memref<1x768xf32, #tpu.memory_space<vmem>>) target_semaphore(%152 : memref<!tpu.dma_semaphore, #tpu.memory_space<semaphore_mem>>)
    %153 = arith.index_cast %arg0 : i32 to index
    %c23 = arith.constant 23 : index
    %154 = memref.load %arg1[%153, %c23] : memref<2x26xi32, #tpu.memory_space<smem>>
    %c0_i32_117 = arith.constant 0 : i32
    %c511_i32_118 = arith.constant 511 : i32
    %155 = arith.maxsi %c0_i32_117, %154 : i32
    %156 = arith.minsi %c511_i32_118, %155 : i32
    %c17_i32_119 = arith.constant 17 : i32
    %c0_i32_120 = arith.constant 0 : i32
    %157 = tpu.memref_slice %arg3[%156, %c0_i32_120] : memref<512x768xf32, #tpu.memory_space<any>> -> memref<1x768xf32, #tpu.memory_space<any>>
    %c17_i32_121 = arith.constant 17 : i32
    %c0_i32_122 = arith.constant 0 : i32
    %158 = tpu.memref_slice %arg5[%c17_i32_121, %c0_i32_122] : memref<24x768xf32, #tpu.memory_space<vmem>> -> memref<1x768xf32, #tpu.memory_space<vmem>>
    %159 = tpu.memref_slice %arg6[%c17_i32_119] : memref<24x!tpu.dma_semaphore, #tpu.memory_space<semaphore_mem>> -> memref<1x!tpu.dma_semaphore, #tpu.memory_space<semaphore_mem>>
    %160 = tpu.memref_squeeze %159 : memref<1x!tpu.dma_semaphore, #tpu.memory_space<semaphore_mem>> -> memref<!tpu.dma_semaphore, #tpu.memory_space<semaphore_mem>>
    tpu.enqueue_dma source(%157 : memref<1x768xf32, #tpu.memory_space<any>>) target(%158 : memref<1x768xf32, #tpu.memory_space<vmem>>) target_semaphore(%160 : memref<!tpu.dma_semaphore, #tpu.memory_space<semaphore_mem>>)
    %161 = arith.index_cast %arg0 : i32 to index
    %c24 = arith.constant 24 : index
    %162 = memref.load %arg1[%161, %c24] : memref<2x26xi32, #tpu.memory_space<smem>>
    %c0_i32_123 = arith.constant 0 : i32
    %c511_i32_124 = arith.constant 511 : i32
    %163 = arith.maxsi %c0_i32_123, %162 : i32
    %164 = arith.minsi %c511_i32_124, %163 : i32
    %c18_i32_125 = arith.constant 18 : i32
    %c0_i32_126 = arith.constant 0 : i32
    %165 = tpu.memref_slice %arg3[%164, %c0_i32_126] : memref<512x768xf32, #tpu.memory_space<any>> -> memref<1x768xf32, #tpu.memory_space<any>>
    %c18_i32_127 = arith.constant 18 : i32
    %c0_i32_128 = arith.constant 0 : i32
    %166 = tpu.memref_slice %arg5[%c18_i32_127, %c0_i32_128] : memref<24x768xf32, #tpu.memory_space<vmem>> -> memref<1x768xf32, #tpu.memory_space<vmem>>
    %167 = tpu.memref_slice %arg6[%c18_i32_125] : memref<24x!tpu.dma_semaphore, #tpu.memory_space<semaphore_mem>> -> memref<1x!tpu.dma_semaphore, #tpu.memory_space<semaphore_mem>>
    %168 = tpu.memref_squeeze %167 : memref<1x!tpu.dma_semaphore, #tpu.memory_space<semaphore_mem>> -> memref<!tpu.dma_semaphore, #tpu.memory_space<semaphore_mem>>
    tpu.enqueue_dma source(%165 : memref<1x768xf32, #tpu.memory_space<any>>) target(%166 : memref<1x768xf32, #tpu.memory_space<vmem>>) target_semaphore(%168 : memref<!tpu.dma_semaphore, #tpu.memory_space<semaphore_mem>>)
    %169 = arith.index_cast %arg0 : i32 to index
    %c25 = arith.constant 25 : index
    %170 = memref.load %arg1[%169, %c25] : memref<2x26xi32, #tpu.memory_space<smem>>
    %c0_i32_129 = arith.constant 0 : i32
    %c511_i32_130 = arith.constant 511 : i32
    %171 = arith.maxsi %c0_i32_129, %170 : i32
    %172 = arith.minsi %c511_i32_130, %171 : i32
    %c19_i32_131 = arith.constant 19 : i32
    %c0_i32_132 = arith.constant 0 : i32
    %173 = tpu.memref_slice %arg3[%172, %c0_i32_132] : memref<512x768xf32, #tpu.memory_space<any>> -> memref<1x768xf32, #tpu.memory_space<any>>
    %c19_i32_133 = arith.constant 19 : i32
    %c0_i32_134 = arith.constant 0 : i32
    %174 = tpu.memref_slice %arg5[%c19_i32_133, %c0_i32_134] : memref<24x768xf32, #tpu.memory_space<vmem>> -> memref<1x768xf32, #tpu.memory_space<vmem>>
    %175 = tpu.memref_slice %arg6[%c19_i32_131] : memref<24x!tpu.dma_semaphore, #tpu.memory_space<semaphore_mem>> -> memref<1x!tpu.dma_semaphore, #tpu.memory_space<semaphore_mem>>
    %176 = tpu.memref_squeeze %175 : memref<1x!tpu.dma_semaphore, #tpu.memory_space<semaphore_mem>> -> memref<!tpu.dma_semaphore, #tpu.memory_space<semaphore_mem>>
    tpu.enqueue_dma source(%173 : memref<1x768xf32, #tpu.memory_space<any>>) target(%174 : memref<1x768xf32, #tpu.memory_space<vmem>>) target_semaphore(%176 : memref<!tpu.dma_semaphore, #tpu.memory_space<semaphore_mem>>)
    %c16_i32_135 = arith.constant 16 : i32
    %c0_i32_136 = arith.constant 0 : i32
    %c0_i32_137 = arith.constant 0 : i32
    %177 = tpu.memref_slice %arg3[%c0_i32_136, %c0_i32_137] : memref<512x768xf32, #tpu.memory_space<any>> -> memref<1x768xf32, #tpu.memory_space<any>>
    %c16_i32_138 = arith.constant 16 : i32
    %c0_i32_139 = arith.constant 0 : i32
    %178 = tpu.memref_slice %arg5[%c16_i32_138, %c0_i32_139] : memref<24x768xf32, #tpu.memory_space<vmem>> -> memref<1x768xf32, #tpu.memory_space<vmem>>
    %179 = tpu.memref_slice %arg6[%c16_i32_135] : memref<24x!tpu.dma_semaphore, #tpu.memory_space<semaphore_mem>> -> memref<1x!tpu.dma_semaphore, #tpu.memory_space<semaphore_mem>>
    %180 = tpu.memref_squeeze %179 : memref<1x!tpu.dma_semaphore, #tpu.memory_space<semaphore_mem>> -> memref<!tpu.dma_semaphore, #tpu.memory_space<semaphore_mem>>
    tpu.wait_dma2 semaphore(%180 : memref<!tpu.dma_semaphore, #tpu.memory_space<semaphore_mem>>) src(%177 : memref<1x768xf32, #tpu.memory_space<any>>) dst(%178 : memref<1x768xf32, #tpu.memory_space<vmem>>)
    %c17_i32_140 = arith.constant 17 : i32
    %c0_i32_141 = arith.constant 0 : i32
    %c0_i32_142 = arith.constant 0 : i32
    %181 = tpu.memref_slice %arg3[%c0_i32_141, %c0_i32_142] : memref<512x768xf32, #tpu.memory_space<any>> -> memref<1x768xf32, #tpu.memory_space<any>>
    %c17_i32_143 = arith.constant 17 : i32
    %c0_i32_144 = arith.constant 0 : i32
    %182 = tpu.memref_slice %arg5[%c17_i32_143, %c0_i32_144] : memref<24x768xf32, #tpu.memory_space<vmem>> -> memref<1x768xf32, #tpu.memory_space<vmem>>
    %183 = tpu.memref_slice %arg6[%c17_i32_140] : memref<24x!tpu.dma_semaphore, #tpu.memory_space<semaphore_mem>> -> memref<1x!tpu.dma_semaphore, #tpu.memory_space<semaphore_mem>>
    %184 = tpu.memref_squeeze %183 : memref<1x!tpu.dma_semaphore, #tpu.memory_space<semaphore_mem>> -> memref<!tpu.dma_semaphore, #tpu.memory_space<semaphore_mem>>
    tpu.wait_dma2 semaphore(%184 : memref<!tpu.dma_semaphore, #tpu.memory_space<semaphore_mem>>) src(%181 : memref<1x768xf32, #tpu.memory_space<any>>) dst(%182 : memref<1x768xf32, #tpu.memory_space<vmem>>)
    %c18_i32_145 = arith.constant 18 : i32
    %c0_i32_146 = arith.constant 0 : i32
    %c0_i32_147 = arith.constant 0 : i32
    %185 = tpu.memref_slice %arg3[%c0_i32_146, %c0_i32_147] : memref<512x768xf32, #tpu.memory_space<any>> -> memref<1x768xf32, #tpu.memory_space<any>>
    %c18_i32_148 = arith.constant 18 : i32
    %c0_i32_149 = arith.constant 0 : i32
    %186 = tpu.memref_slice %arg5[%c18_i32_148, %c0_i32_149] : memref<24x768xf32, #tpu.memory_space<vmem>> -> memref<1x768xf32, #tpu.memory_space<vmem>>
    %187 = tpu.memref_slice %arg6[%c18_i32_145] : memref<24x!tpu.dma_semaphore, #tpu.memory_space<semaphore_mem>> -> memref<1x!tpu.dma_semaphore, #tpu.memory_space<semaphore_mem>>
    %188 = tpu.memref_squeeze %187 : memref<1x!tpu.dma_semaphore, #tpu.memory_space<semaphore_mem>> -> memref<!tpu.dma_semaphore, #tpu.memory_space<semaphore_mem>>
    tpu.wait_dma2 semaphore(%188 : memref<!tpu.dma_semaphore, #tpu.memory_space<semaphore_mem>>) src(%185 : memref<1x768xf32, #tpu.memory_space<any>>) dst(%186 : memref<1x768xf32, #tpu.memory_space<vmem>>)
    %c19_i32_150 = arith.constant 19 : i32
    %c0_i32_151 = arith.constant 0 : i32
    %c0_i32_152 = arith.constant 0 : i32
    %189 = tpu.memref_slice %arg3[%c0_i32_151, %c0_i32_152] : memref<512x768xf32, #tpu.memory_space<any>> -> memref<1x768xf32, #tpu.memory_space<any>>
    %c19_i32_153 = arith.constant 19 : i32
    %c0_i32_154 = arith.constant 0 : i32
    %190 = tpu.memref_slice %arg5[%c19_i32_153, %c0_i32_154] : memref<24x768xf32, #tpu.memory_space<vmem>> -> memref<1x768xf32, #tpu.memory_space<vmem>>
    %191 = tpu.memref_slice %arg6[%c19_i32_150] : memref<24x!tpu.dma_semaphore, #tpu.memory_space<semaphore_mem>> -> memref<1x!tpu.dma_semaphore, #tpu.memory_space<semaphore_mem>>
    %192 = tpu.memref_squeeze %191 : memref<1x!tpu.dma_semaphore, #tpu.memory_space<semaphore_mem>> -> memref<!tpu.dma_semaphore, #tpu.memory_space<semaphore_mem>>
    tpu.wait_dma2 semaphore(%192 : memref<!tpu.dma_semaphore, #tpu.memory_space<semaphore_mem>>) src(%189 : memref<1x768xf32, #tpu.memory_space<any>>) dst(%190 : memref<1x768xf32, #tpu.memory_space<vmem>>)
    %c16_155 = arith.constant 16 : index
    %c0_156 = arith.constant 0 : index
    %193 = vector.load %arg5[%c16_155, %c0_156] : memref<24x768xf32, #tpu.memory_space<vmem>>, vector<4x768xf32>
    %c0_157 = arith.constant 0 : index
    %c72 = arith.constant 72 : index
    %c0_158 = arith.constant 0 : index
    %194 = vector.load %arg4[%c0_157, %c72, %c0_158] : memref<1x76x768xf32, #tpu.memory_space<vmem>>, vector<1x4x768xf32>
    %195 = vector.shape_cast %194 : vector<1x4x768xf32> to vector<4x768xf32>
    %196 = vector.shape_cast %193 : vector<4x768xf32> to vector<1x4x768xf32>
    tpu.vector_store %arg4[%c0_157, %c72, %c0_158], %196 {strides = array<i32>} : memref<1x76x768xf32, #tpu.memory_space<vmem>>, vector<1x4x768xf32>,
    return
  }
  func.func @transform_0(%arg0: i32, %arg1: memref<2x26xi32, #tpu.memory_space<smem>>) -> (i32, i32) {
    %c0_i32 = arith.constant 0 : i32
    %c0_i32_0 = arith.constant 0 : i32
    %c0_i32_1 = arith.constant 0 : i32
    return %c0_i32, %c0_i32_0 : i32, i32
  }
  func.func @transform_2(%arg0: i32, %arg1: memref<2x26xi32, #tpu.memory_space<smem>>) -> (i32, i32, i32) {
    %c0_i32 = arith.constant 0 : i32
    %c0_i32_0 = arith.constant 0 : i32
    %c0_i32_1 = arith.constant 0 : i32
    return %arg0, %c0_i32, %c0_i32_0 : i32, i32, i32
  }
}

</mosaic_0001>

<llo_original>
// kernel: tpu_custom_call.1
$region0: #{tpu_custom_call.1}
  #allocation0 [shape = 'u32[]', space=smem, size = 0x4, offset = 0x4, fixed_abs, tag = 'smem constant byte address 0x4 - core index']
  #allocation1 [shape = 'u32[144,128]{1,0:T(1,128)}', space=vmem, size = 0x12000, scoped, tag = 'internal scratch']
  #allocation2 [shape = 'f32[24,768]{1,0:T(8,128)}', space=vmem, size = 0x12000, scoped, tag = 'scratch operand']
  #allocation3 [shape = 's32[24]{0}', space=sflag, size = 0x60, scoped, tag = 'scratch operand']
  #allocation4 [shape = 's32[1]{0}', space=sflag, size = 0x4, scoped, tag = 'scoped memory for tpu_custom_call.1']
  #allocation5 [shape = 'u8[1024]{0}', space=smem, size = 0x400, scoped, tag = 'prefetched SMEM operand 0']
  #allocation8 [shape = 's32[]', space=sflag, size = 0x4, offset = 0, fixed_abs, tag = 'sflag constant byte address 0x0 - dummy sync flag']
  #allocation9 [shape = 's32[]', space=sflag, size = 0x4, offset = 0, fixed_abs, tag = 'sflag constant byte address 0x0 - dummy sync flag']
  #allocation10 [shape = 's32[]', space=sflag, size = 0x4, offset = 0, fixed_abs, tag = 'sflag constant byte address 0x0 - dummy sync flag']
  #allocation11 [shape = 's32[]', space=sflag, size = 0x4, offset = 0, fixed_abs, tag = 'sflag constant byte address 0x0 - dummy sync flag']
  #allocation12 [shape = 's32[]', space=sflag, size = 0x4, offset = 0, fixed_abs, tag = 'sflag constant byte address 0x0 - dummy sync flag']
  #allocation13 [shape = 's32[]', space=sflag, size = 0x4, offset = 0, fixed_abs, tag = 'sflag constant byte address 0x0 - dummy sync flag']
  #allocation14 [shape = 's32[]', space=sflag, size = 0x4, offset = 0, fixed_abs, tag = 'sflag constant byte address 0x0 - dummy sync flag']
  #allocation15 [shape = 's32[]', space=sflag, size = 0x4, offset = 0, fixed_abs, tag = 'sflag constant byte address 0x0 - dummy sync flag']
  #allocation16 [shape = 's32[]', space=sflag, size = 0x4, offset = 0, fixed_abs, tag = 'sflag constant byte address 0x0 - dummy sync flag']
  #allocation17 [shape = 's32[]', space=sflag, size = 0x4, offset = 0, fixed_abs, tag = 'sflag constant byte address 0x0 - dummy sync flag']
  #allocation18 [shape = 's32[]', space=sflag, size = 0x4, offset = 0, fixed_abs, tag = 'sflag constant byte address 0x0 - dummy sync flag']
  #allocation19 [shape = 's32[]', space=sflag, size = 0x4, offset = 0, fixed_abs, tag = 'sflag constant byte address 0x0 - dummy sync flag']
  #allocation20 [shape = 's32[]', space=sflag, size = 0x4, offset = 0, fixed_abs, tag = 'sflag constant byte address 0x0 - dummy sync flag']
  #allocation21 [shape = 's32[]', space=sflag, size = 0x4, offset = 0, fixed_abs, tag = 'sflag constant byte address 0x0 - dummy sync flag']
  #allocation22 [shape = 's32[]', space=sflag, size = 0x4, offset = 0, fixed_abs, tag = 'sflag constant byte address 0x0 - dummy sync flag']
  #allocation23 [shape = 's32[]', space=sflag, size = 0x4, offset = 0, fixed_abs, tag = 'sflag constant byte address 0x0 - dummy sync flag']
  #allocation24 [shape = 's32[]', space=sflag, size = 0x4, offset = 0, fixed_abs, tag = 'sflag constant byte address 0x0 - dummy sync flag']
  #allocation25 [shape = 's32[]', space=sflag, size = 0x4, offset = 0, fixed_abs, tag = 'sflag constant byte address 0x0 - dummy sync flag']
  #allocation26 [shape = 's32[]', space=sflag, size = 0x4, offset = 0, fixed_abs, tag = 'sflag constant byte address 0x0 - dummy sync flag']
  #allocation27 [shape = 's32[]', space=sflag, size = 0x4, offset = 0, fixed_abs, tag = 'sflag constant byte address 0x0 - dummy sync flag']
  #allocation28 [shape = 's32[]', space=sflag, size = 0x4, offset = 0, fixed_abs, tag = 'sflag constant byte address 0x0 - dummy sync flag']
  #allocation29 [shape = 's32[]', space=sflag, size = 0x4, offset = 0, fixed_abs, tag = 'sflag constant byte address 0x0 - dummy sync flag']
  #allocation30 [shape = 's32[]', space=sflag, size = 0x4, offset = 0, fixed_abs, tag = 'sflag constant byte address 0x0 - dummy sync flag']
  #allocation31 [shape = 's32[]', space=sflag, size = 0x4, offset = 0, fixed_abs, tag = 'sflag constant byte address 0x0 - dummy sync flag']
  #allocation32 [shape = 's32[]', space=sflag, size = 0x4, offset = 0, fixed_abs, tag = 'sflag constant byte address 0x0 - dummy sync flag']
  #allocation33 [shape = 's32[]', space=sflag, size = 0x4, offset = 0, fixed_abs, tag = 'sflag constant byte address 0x0 - dummy sync flag']
  %s0 = inlined_call_operand.hbm [shape: s32[2,26], index: 0, kind: input, shape index: {}]
  %s1 = inlined_call_operand.hbm [shape: f32[50,768], index: 1, kind: input, shape index: {}]
  %s2 = inlined_call_operand.hbm [shape: f32[512,768], index: 2, kind: input, shape index: {}]
  %s3 = inlined_call_operand.vmem [shape: f32[2,76,768], index: 3, kind: output, shape index: {}]
  %s4 = sld [smem:[#allocation0]]
  $region52: #{tpu_custom_call.1} parent=0
    _
  %s6 = ssub.s32 1, %s4
  %s7 = scalar_select 0, %s6, %s4
  %9 = dma.hbm_to_smem %s0, 32, [#allocation5], [#allocation4]
  %10 = dma.done [#allocation4], 32
  %11 = sfence
  $region1: #{tpu_custom_call.1} parent=0
    #allocation6 [shape = 'u8[172032]{0}', space=vmem, size = 0x2a000, scoped, tag = 'input window, operand 1, single buffered']
    #allocation7 [shape = 's32[2]{0}', space=sflag, size = 0x8, scoped, tag = 'scoped memory for tpu_custom_call.1']
    %12 = vsyncpa [#allocation7], 0
    loop: start=0, step=1, limit=4
    $region2: #{tpu_custom_call.1} parent=1 // loop_pre_header
      _
    $region3: #{tpu_custom_call.1} parent=1 // loop_header
      %s14 = sphi 0, %s18
      %p15 = scmp.ge.s32.totalorder %s14, 4
      %s22 = sphi 0, %s22
      %s24 = sphi 0, %s22
      %s25 = sphi 0, %s24
      %s39 = sphi 0, %s25
      %s45 = sphi 0, %s47
      %s48 = sphi 0, %s45
      %s49 = sphi 0, %s48
      %s65 = sphi 0, %s49
    $region4: #{tpu_custom_call.1} parent=1 // loop_header_branch
      %17 = sbr.rel (%p15) target = $region8
    $region5: #{tpu_custom_call.1} parent=1 // loop_body
      %s19 = ssub.s32 %s14, 1
      %s20 = ssub.s32 %s14, 2
      %s21 = sadd.s32 %s14, 1
      %s23 = sadd.s32 %s22, 1
      %p26 = scmp.eq.s32.totalorder %s14, 1
      %p27 = scmp.ne.s32.totalorder %s22, %s24
      %p28 = scmp.eq.s32.totalorder %s14, 0
      %p29 = por %p27, %p28
      %p30 = scmp.ne.s32.totalorder %s22, %s24
      %p31 = scmp.eq.s32.totalorder %s19, 1
      %p32 = por %p30, %p31
      %p33 = scmp.ne.s32.totalorder %s24, %s25
      %p34 = scmp.eq.s32.totalorder %s19, 0
      %p35 = por %p33, %p34
      %p36 = scmp.ne.s32.totalorder %s24, %s25
      %p37 = scmp.eq.s32.totalorder %s20, 1
      %p38 = por %p36, %p37
      %p40 = scmp.ne.s32.totalorder %s25, %s39
      %p41 = scmp.eq.s32.totalorder %s20, 0
      %p42 = por %p40, %p41
      %s43 = ssub.s32 %s14, %s21
      %p44 = scmp.eq.s32.totalorder %s43, 0
      %s46 = sadd.s32 %s45, 1
      %s47 = scalar_select %p44, %s45, %s46
      %p50 = pneg %p44
      %p51 = scmp.eq.s32.totalorder %s14, 1
      %p52 = por %p50, %p51
      %p53 = scmp.ne.s32.totalorder %s45, %s48
      %p54 = scmp.eq.s32.totalorder %s14, 0
      %p55 = por %p53, %p54
      %p56 = scmp.ne.s32.totalorder %s45, %s48
      %p57 = scmp.eq.s32.totalorder %s19, 1
      %p58 = por %p56, %p57
      %p59 = scmp.ne.s32.totalorder %s48, %s49
      %p60 = scmp.eq.s32.totalorder %s19, 0
      %p61 = por %p59, %p60
      %p62 = scmp.ne.s32.totalorder %s48, %s49
      %p63 = scmp.eq.s32.totalorder %s20, 1
      %p64 = por %p62, %p63
      %p66 = scmp.ne.s32.totalorder %s49, %s65
      %p67 = scmp.eq.s32.totalorder %s20, 0
      %p68 = por %p66, %p67
      %p69 = scmp.le.s32.totalorder 1, %s14
      %p70 = scmp.lt.s32.totalorder %s14, 3
      %p71 = pnand %p69, %p70
      %p72 = pneg %p71
      // Predicated region
      $region9: #{tpu_custom_call.1} parent=5 // pred_check
        _
      $region10: #{tpu_custom_call.1} parent=5 // pred_check_branch
        %74 = sbr.rel (%p71) target = $region12
      $region11: #{tpu_custom_call.1} parent=5 // pred_region
        %s75 = ssub.s32 %s14, 1
        // Predicated region
        $region13: #{tpu_custom_call.1} parent=11 // pred_check
          %p76 = pneg %p35
        $region14: #{tpu_custom_call.1} parent=11 // pred_check_branch
          %78 = sbr.rel (%p76) target = $region16
        $region15: #{tpu_custom_call.1} parent=11 // pred_region
          %s80 = ssub.s32 5376, 5376
          %81 = vsyncadd [#allocation7], %s80
          %s82 = sshll.u32 [#allocation6], 4
          %s83 = int_to_ptr.vmem [resolvable:$true] %s82
          %88 = dma.hbm_to_vmem [thread:$0]  %s1, 5376, %s83, [#allocation7], 768, 768, 48
        $region16: #{tpu_custom_call.1} parent=11 // pred_fallthru
          _
      $region12: #{tpu_custom_call.1} parent=5 // pred_fallthru
        _
      %p89 = scmp.lt.s32.totalorder %s14, 2
      // Predicated region
      $region17: #{tpu_custom_call.1} parent=5 // pred_check
        %p90 = pneg %p89
      $region18: #{tpu_custom_call.1} parent=5 // pred_check_branch
        %92 = sbr.rel (%p90) target = $region20
      $region19: #{tpu_custom_call.1} parent=5 // pred_region
        _
      $region20: #{tpu_custom_call.1} parent=5 // pred_fallthru
        _
      %p93 = scmp.le.s32.totalorder 1, %s14
      %p94 = scmp.lt.s32.totalorder %s14, 3
      %p95 = pnand %p93, %p94
      %p96 = pneg %p95
      // Predicated region
      $region21: #{tpu_custom_call.1} parent=5 // pred_check
        _
      $region22: #{tpu_custom_call.1} parent=5 // pred_check_branch
        %98 = sbr.rel (%p95) target = $region24
      $region23: #{tpu_custom_call.1} parent=5 // pred_region
        %s99 = ssub.s32 %s14, 1
        // Predicated region
        $region25: #{tpu_custom_call.1} parent=23 // pred_check
          %p100 = pneg %p35
        $region26: #{tpu_custom_call.1} parent=23 // pred_check_branch
          %102 = sbr.rel (%p100) target = $region28
        $region27: #{tpu_custom_call.1} parent=23 // pred_region
          %103 = dma.done [#allocation7], 5376
        $region28: #{tpu_custom_call.1} parent=23 // pred_fallthru
          _
        %p104 = pneg %p35
        %p105 = pneg %p32
        %p106 = pneg %p61
        %p107 = pneg %p58
        %p108 = scmp.lt.s32.totalorder %s19, 1
        %s109 = scalar_select %p108, %s19, 1
        %s110 = smul.addr %s109, 60
        %s111 = smul.addr %s110, 8
        %s112 = scalar_lea.vmem %s3, %s111
        %p113 = scmp.lt.s32.totalorder %s19, 1
        %s114 = scalar_select %p113, %s19, 1
        %s115 = smul.addr %s114, 60
        %s116 = smul.addr %s115, 8
        %s117 = scalar_lea.vmem %s3, %s116
        %s118 = smul.u32 %s19, 128
        %s119 = sld [smem:[#allocation5 + %s118]]
        %p120 = scmp.gt.s32.totalorder %s119, 0
        %s121 = scalar_select %p120, %s119, 0
        %p122 = scmp.lt.s32.totalorder %s121, 511
        %s123 = scalar_select %p122, %s121, 511
        %s124 = sshrl.u32 %s123, 3
        %s125 = sand.u32 %s123, 7
        %s126 = smul.u32 %s124, 48
        %s127 = sadd.s32 %s125, %s126
        %s128 = smul.addr %s127, 16
        %s129 = scalar_lea.hbm %s2, %s128
        %s130 = scalar_lea.vmem [#allocation2], 96
        %s131 = scalar_lea.sflag [#allocation3], 16
        %s133 = sshll.u32 %s130, 4
        %s134 = int_to_ptr.vmem [resolvable:$true] %s133
        %136 = dma.hbm_to_vmem [thread:$0]  %s129, 96, %s134, %s131, 128, 128, 1
        %s137 = sadd.s32 %s118, 1
        %s138 = sld [smem:[#allocation5 + %s137]]
        %p139 = scmp.gt.s32.totalorder %s138, 0
        %s140 = scalar_select %p139, %s138, 0
        %p141 = scmp.lt.s32.totalorder %s140, 511
        %s142 = scalar_select %p141, %s140, 511
        %s143 = sshrl.u32 %s142, 3
        %s144 = sand.u32 %s142, 7
        %s145 = smul.u32 %s143, 48
        %s146 = sadd.s32 %s144, %s145
        %s147 = smul.addr %s146, 16
        %s148 = scalar_lea.hbm %s2, %s147
        %s149 = scalar_lea.vmem [#allocation2], 97
        %s150 = scalar_lea.sflag [#allocation3], 17
        %s152 = sshll.u32 %s149, 4
        %s153 = int_to_ptr.vmem [resolvable:$true] %s152
        %155 = dma.hbm_to_vmem [thread:$0]  %s148, 96, %s153, %s150, 128, 128, 1
        %s156 = sadd.s32 %s118, 2
        %s157 = sld [smem:[#allocation5 + %s156]]
        %p158 = scmp.gt.s32.totalorder %s157, 0
        %s159 = scalar_select %p158, %s157, 0
        %p160 = scmp.lt.s32.totalorder %s159, 511
        %s161 = scalar_select %p160, %s159, 511
        %s162 = sshrl.u32 %s161, 3
        %s163 = sand.u32 %s161, 7
        %s164 = smul.u32 %s162, 48
        %s165 = sadd.s32 %s163, %s164
        %s166 = smul.addr %s165, 16
        %s167 = scalar_lea.hbm %s2, %s166
        %s168 = scalar_lea.vmem [#allocation2], 98
        %s169 = scalar_lea.sflag [#allocation3], 18
        %s171 = sshll.u32 %s168, 4
        %s172 = int_to_ptr.vmem [resolvable:$true] %s171
        %174 = dma.hbm_to_vmem [thread:$0]  %s167, 96, %s172, %s169, 128, 128, 1
        %s175 = sadd.s32 %s118, 3
        %s176 = sld [smem:[#allocation5 + %s175]]
        %p177 = scmp.gt.s32.totalorder %s176, 0
        %s178 = scalar_select %p177, %s176, 0
        %p179 = scmp.lt.s32.totalorder %s178, 511
        %s180 = scalar_select %p179, %s178, 511
        %s181 = sshrl.u32 %s180, 3
        %s182 = sand.u32 %s180, 7
        %s183 = smul.u32 %s181, 48
        %s184 = sadd.s32 %s182, %s183
        %s185 = smul.addr %s184, 16
        %s186 = scalar_lea.hbm %s2, %s185
        %s187 = scalar_lea.vmem [#allocation2], 99
        %s188 = scalar_lea.sflag [#allocation3], 19
        %s190 = sshll.u32 %s187, 4
        %s191 = int_to_ptr.vmem [resolvable:$true] %s190
        %193 = dma.hbm_to_vmem [thread:$0]  %s186, 96, %s191, %s188, 128, 128, 1
        %s194 = sadd.s32 %s118, 4
        %s195 = sld [smem:[#allocation5 + %s194]]
        %p196 = scmp.gt.s32.totalorder %s195, 0
        %s197 = scalar_select %p196, %s195, 0
        %p198 = scmp.lt.s32.totalorder %s197, 511
        %s199 = scalar_select %p198, %s197, 511
        %s200 = sshrl.u32 %s199, 3
        %s201 = sand.u32 %s199, 7
        %s202 = smul.u32 %s200, 48
        %s203 = sadd.s32 %s201, %s202
        %s204 = smul.addr %s203, 16
        %s205 = scalar_lea.hbm %s2, %s204
        %s206 = scalar_lea.vmem [#allocation2], 100
        %s207 = scalar_lea.sflag [#allocation3], 20
        %s209 = sshll.u32 %s206, 4
        %s210 = int_to_ptr.vmem [resolvable:$true] %s209
        %212 = dma.hbm_to_vmem [thread:$0]  %s205, 96, %s210, %s207, 128, 128, 1
        %s213 = sadd.s32 %s118, 5
        %s214 = sld [smem:[#allocation5 + %s213]]
        %p215 = scmp.gt.s32.totalorder %s214, 0
        %s216 = scalar_select %p215, %s214, 0
        %p217 = scmp.lt.s32.totalorder %s216, 511
        %s218 = scalar_select %p217, %s216, 511
        %s219 = sshrl.u32 %s218, 3
        %s220 = sand.u32 %s218, 7
        %s221 = smul.u32 %s219, 48
        %s222 = sadd.s32 %s220, %s221
        %s223 = smul.addr %s222, 16
        %s224 = scalar_lea.hbm %s2, %s223
        %s225 = scalar_lea.vmem [#allocation2], 101
        %s226 = scalar_lea.sflag [#allocation3], 21
        %s228 = sshll.u32 %s225, 4
        %s229 = int_to_ptr.vmem [resolvable:$true] %s228
        %231 = dma.hbm_to_vmem [thread:$0]  %s224, 96, %s229, %s226, 128, 128, 1
        %s232 = sadd.s32 %s118, 6
        %s233 = sld [smem:[#allocation5 + %s232]]
        %p234 = scmp.gt.s32.totalorder %s233, 0
        %s235 = scalar_select %p234, %s233, 0
        %p236 = scmp.lt.s32.totalorder %s235, 511
        %s237 = scalar_select %p236, %s235, 511
        %s238 = sshrl.u32 %s237, 3
        %s239 = sand.u32 %s237, 7
        %s240 = smul.u32 %s238, 48
        %s241 = sadd.s32 %s239, %s240
        %s242 = smul.addr %s241, 16
        %s243 = scalar_lea.hbm %s2, %s242
        %s245 = sshll.u32 [#allocation2], 4
        %s246 = int_to_ptr.vmem [resolvable:$true] %s245
        %248 = dma.hbm_to_vmem [thread:$0]  %s243, 96, %s246, [#allocation3], 128, 128, 1
        %s249 = sadd.s32 %s118, 7
        %s250 = sld [smem:[#allocation5 + %s249]]
        %p251 = scmp.gt.s32.totalorder %s250, 0
        %s252 = scalar_select %p251, %s250, 0
        %p253 = scmp.lt.s32.totalorder %s252, 511
        %s254 = scalar_select %p253, %s252, 511
        %s255 = sshrl.u32 %s254, 3
        %s256 = sand.u32 %s254, 7
        %s257 = smul.u32 %s255, 48
        %s258 = sadd.s32 %s256, %s257
        %s259 = smul.addr %s258, 16
        %s260 = scalar_lea.hbm %s2, %s259
        %s261 = scalar_lea.vmem [#allocation2], 1
        %s262 = scalar_lea.sflag [#allocation3], 1
        %s264 = sshll.u32 %s261, 4
        %s265 = int_to_ptr.vmem [resolvable:$true] %s264
        %267 = dma.hbm_to_vmem [thread:$0]  %s260, 96, %s265, %s262, 128, 128, 1
        %s268 = sadd.s32 %s118, 8
        %s269 = sld [smem:[#allocation5 + %s268]]
        %p270 = scmp.gt.s32.totalorder %s269, 0
        %s271 = scalar_select %p270, %s269, 0
        %p272 = scmp.lt.s32.totalorder %s271, 511
        %s273 = scalar_select %p272, %s271, 511
        %s274 = sshrl.u32 %s273, 3
        %s275 = sand.u32 %s273, 7
        %s276 = smul.u32 %s274, 48
        %s277 = sadd.s32 %s275, %s276
        %s278 = smul.addr %s277, 16
        %s279 = scalar_lea.hbm %s2, %s278
        %s280 = scalar_lea.vmem [#allocation2], 2
        %s281 = scalar_lea.sflag [#allocation3], 2
        %s283 = sshll.u32 %s280, 4
        %s284 = int_to_ptr.vmem [resolvable:$true] %s283
        %286 = dma.hbm_to_vmem [thread:$0]  %s279, 96, %s284, %s281, 128, 128, 1
        %s287 = sadd.s32 %s118, 9
        %s288 = sld [smem:[#allocation5 + %s287]]
        %p289 = scmp.gt.s32.totalorder %s288, 0
        %s290 = scalar_select %p289, %s288, 0
        %p291 = scmp.lt.s32.totalorder %s290, 511
        %s292 = scalar_select %p291, %s290, 511
        %s293 = sshrl.u32 %s292, 3
        %s294 = sand.u32 %s292, 7
        %s295 = smul.u32 %s293, 48
        %s296 = sadd.s32 %s294, %s295
        %s297 = smul.addr %s296, 16
        %s298 = scalar_lea.hbm %s2, %s297
        %s299 = scalar_lea.vmem [#allocation2], 3
        %s300 = scalar_lea.sflag [#allocation3], 3
        %s302 = sshll.u32 %s299, 4
        %s303 = int_to_ptr.vmem [resolvable:$true] %s302
        %305 = dma.hbm_to_vmem [thread:$0]  %s298, 96, %s303, %s300, 128, 128, 1
        %s306 = sadd.s32 %s118, 10
        %s307 = sld [smem:[#allocation5 + %s306]]
        %p308 = scmp.gt.s32.totalorder %s307, 0
        %s309 = scalar_select %p308, %s307, 0
        %p310 = scmp.lt.s32.totalorder %s309, 511
        %s311 = scalar_select %p310, %s309, 511
        %s312 = sshrl.u32 %s311, 3
        %s313 = sand.u32 %s311, 7
        %s314 = smul.u32 %s312, 48
        %s315 = sadd.s32 %s313, %s314
        %s316 = smul.addr %s315, 16
        %s317 = scalar_lea.hbm %s2, %s316
        %s318 = scalar_lea.vmem [#allocation2], 4
        %s319 = scalar_lea.sflag [#allocation3], 4
        %s321 = sshll.u32 %s318, 4
        %s322 = int_to_ptr.vmem [resolvable:$true] %s321
        %324 = dma.hbm_to_vmem [thread:$0]  %s317, 96, %s322, %s319, 128, 128, 1
        %s325 = sadd.s32 %s118, 11
        %s326 = sld [smem:[#allocation5 + %s325]]
        %p327 = scmp.gt.s32.totalorder %s326, 0
        %s328 = scalar_select %p327, %s326, 0
        %p329 = scmp.lt.s32.totalorder %s328, 511
        %s330 = scalar_select %p329, %s328, 511
        %s331 = sshrl.u32 %s330, 3
        %s332 = sand.u32 %s330, 7
        %s333 = smul.u32 %s331, 48
        %s334 = sadd.s32 %s332, %s333
        %s335 = smul.addr %s334, 16
        %s336 = scalar_lea.hbm %s2, %s335
        %s337 = scalar_lea.vmem [#allocation2], 5
        %s338 = scalar_lea.sflag [#allocation3], 5
        %s340 = sshll.u32 %s337, 4
        %s341 = int_to_ptr.vmem [resolvable:$true] %s340
        %343 = dma.hbm_to_vmem [thread:$0]  %s336, 96, %s341, %s338, 128, 128, 1
        %s344 = sadd.s32 %s118, 12
        %s345 = sld [smem:[#allocation5 + %s344]]
        %p346 = scmp.gt.s32.totalorder %s345, 0
        %s347 = scalar_select %p346, %s345, 0
        %p348 = scmp.lt.s32.totalorder %s347, 511
        %s349 = scalar_select %p348, %s347, 511
        %s350 = sshrl.u32 %s349, 3
        %s351 = sand.u32 %s349, 7
        %s352 = smul.u32 %s350, 48
        %s353 = sadd.s32 %s351, %s352
        %s354 = smul.addr %s353, 16
        %s355 = scalar_lea.hbm %s2, %s354
        %s356 = scalar_lea.vmem [#allocation2], 6
        %s357 = scalar_lea.sflag [#allocation3], 6
        %s359 = sshll.u32 %s356, 4
        %s360 = int_to_ptr.vmem [resolvable:$true] %s359
        %362 = dma.hbm_to_vmem [thread:$0]  %s355, 96, %s360, %s357, 128, 128, 1
        %s363 = sadd.s32 %s118, 13
        %s364 = sld [smem:[#allocation5 + %s363]]
        %p365 = scmp.gt.s32.totalorder %s364, 0
        %s366 = scalar_select %p365, %s364, 0
        %p367 = scmp.lt.s32.totalorder %s366, 511
        %s368 = scalar_select %p367, %s366, 511
        %s369 = sshrl.u32 %s368, 3
        %s370 = sand.u32 %s368, 7
        %s371 = smul.u32 %s369, 48
        %s372 = sadd.s32 %s370, %s371
        %s373 = smul.addr %s372, 16
        %s374 = scalar_lea.hbm %s2, %s373
        %s375 = scalar_lea.vmem [#allocation2], 7
        %s376 = scalar_lea.sflag [#allocation3], 7
        %s378 = sshll.u32 %s375, 4
        %s379 = int_to_ptr.vmem [resolvable:$true] %s378
        %381 = dma.hbm_to_vmem [thread:$0]  %s374, 96, %s379, %s376, 128, 128, 1
        %v382 = vld [vmem:[#allocation6] sm:$0xff]
        %v383 = vld [vmem:[#allocation6 + $0x8] sm:$0xff]
        %v384 = vld [vmem:[#allocation6 + $0x10] sm:$0xff]
        %v385 = vld [vmem:[#allocation6 + $0x18] sm:$0xff]
        %v386 = vld [vmem:[#allocation6 + $0x20] sm:$0xff]
        %v387 = vld [vmem:[#allocation6 + $0x28] sm:$0xff]
        %v388 = vld [vmem:[#allocation6 + $0x30] sm:$0xff]
        %v389 = vld [vmem:[#allocation6 + $0x38] sm:$0xff]
        %v390 = vld [vmem:[#allocation6 + $0x40] sm:$0xff]
        %v391 = vld [vmem:[#allocation6 + $0x48] sm:$0xff]
        %v392 = vld [vmem:[#allocation6 + $0x50] sm:$0xff]
        %v393 = vld [vmem:[#allocation6 + $0x58] sm:$0xff]
        %v394 = vld [vmem:[#allocation6 + $0x60] sm:$0xff]
        %v395 = vld [vmem:[#allocation6 + $0x68] sm:$0xff]
        %v396 = vld [vmem:[#allocation6 + $0x70] sm:$0xff]
        %v397 = vld [vmem:[#allocation6 + $0x78] sm:$0xff]
        %v398 = vld [vmem:[#allocation6 + $0x80] sm:$0xff]
        %v399 = vld [vmem:[#allocation6 + $0x88] sm:$0xff]
        %v400 = vld [vmem:[#allocation6 + $0x90] sm:$0xff]
        %v401 = vld [vmem:[#allocation6 + $0x98] sm:$0xff]
        %v402 = vld [vmem:[#allocation6 + $0xa0] sm:$0xff]
        %v403 = vld [vmem:[#allocation6 + $0xa8] sm:$0xff]
        %v404 = vld [vmem:[#allocation6 + $0xb0] sm:$0xff]
        %v405 = vld [vmem:[#allocation6 + $0xb8] sm:$0xff]
        %v406 = vld [vmem:[#allocation6 + $0xc0] sm:$0xff]
        %v407 = vld [vmem:[#allocation6 + $0xc8] sm:$0xff]
        %v408 = vld [vmem:[#allocation6 + $0xd0] sm:$0xff]
        %v409 = vld [vmem:[#allocation6 + $0xd8] sm:$0xff]
        %v410 = vld [vmem:[#allocation6 + $0xe0] sm:$0xff]
        %v411 = vld [vmem:[#allocation6 + $0xe8] sm:$0xff]
        %v412 = vld [vmem:[#allocation6 + $0xf0] sm:$0xff]
        %v413 = vld [vmem:[#allocation6 + $0xf8] sm:$0xff]
        %v414 = vld [vmem:[#allocation6 + $0x100] sm:$0xff]
        %v415 = vld [vmem:[#allocation6 + $0x108] sm:$0xff]
        %v416 = vld [vmem:[#allocation6 + $0x110] sm:$0xff]
        %v417 = vld [vmem:[#allocation6 + $0x118] sm:$0xff]
        %v418 = vld [vmem:[#allocation6 + $0x120] sm:$0x3]
        %v419 = vld [vmem:[#allocation6 + $0x128] sm:$0x3]
        %v420 = vld [vmem:[#allocation6 + $0x130] sm:$0x3]
        %v421 = vld [vmem:[#allocation6 + $0x138] sm:$0x3]
        %v422 = vld [vmem:[#allocation6 + $0x140] sm:$0x3]
        %v423 = vld [vmem:[#allocation6 + $0x148] sm:$0x3]
        %424 = vst [vmem:[%s117] sm:$0xff] %v382
        %425 = vst [vmem:[%s117 + $0x8] sm:$0xff] %v383
        %426 = vst [vmem:[%s117 + $0x10] sm:$0xff] %v384
        %427 = vst [vmem:[%s117 + $0x18] sm:$0xff] %v385
        %428 = vst [vmem:[%s117 + $0x20] sm:$0xff] %v386
        %429 = vst [vmem:[%s117 + $0x28] sm:$0xff] %v387
        %430 = vst [vmem:[%s117 + $0x30] sm:$0xff] %v388
        %431 = vst [vmem:[%s117 + $0x38] sm:$0xff] %v389
        %432 = vst [vmem:[%s117 + $0x40] sm:$0xff] %v390
        %433 = vst [vmem:[%s117 + $0x48] sm:$0xff] %v391
        %434 = vst [vmem:[%s117 + $0x50] sm:$0xff] %v392
        %435 = vst [vmem:[%s117 + $0x58] sm:$0xff] %v393
        %436 = vst [vmem:[%s117 + $0x60] sm:$0xff] %v394
        %437 = vst [vmem:[%s117 + $0x68] sm:$0xff] %v395
        %438 = vst [vmem:[%s117 + $0x70] sm:$0xff] %v396
        %439 = vst [vmem:[%s117 + $0x78] sm:$0xff] %v397
        %440 = vst [vmem:[%s117 + $0x80] sm:$0xff] %v398
        %441 = vst [vmem:[%s117 + $0x88] sm:$0xff] %v399
        %442 = vst [vmem:[%s117 + $0x90] sm:$0xff] %v400
        %443 = vst [vmem:[%s117 + $0x98] sm:$0xff] %v401
        %444 = vst [vmem:[%s117 + $0xa0] sm:$0xff] %v402
        %445 = vst [vmem:[%s117 + $0xa8] sm:$0xff] %v403
        %446 = vst [vmem:[%s117 + $0xb0] sm:$0xff] %v404
        %447 = vst [vmem:[%s117 + $0xb8] sm:$0xff] %v405
        %448 = vst [vmem:[%s117 + $0xc0] sm:$0xff] %v406
        %449 = vst [vmem:[%s117 + $0xc8] sm:$0xff] %v407
        %450 = vst [vmem:[%s117 + $0xd0] sm:$0xff] %v408
        %451 = vst [vmem:[%s117 + $0xd8] sm:$0xff] %v409
        %452 = vst [vmem:[%s117 + $0xe0] sm:$0xff] %v410
        %453 = vst [vmem:[%s117 + $0xe8] sm:$0xff] %v411
        %454 = vst [vmem:[%s117 + $0xf0] sm:$0xff] %v412
        %455 = vst [vmem:[%s117 + $0xf8] sm:$0xff] %v413
        %456 = vst [vmem:[%s117 + $0x100] sm:$0xff] %v414
        %457 = vst [vmem:[%s117 + $0x108] sm:$0xff] %v415
        %458 = vst [vmem:[%s117 + $0x110] sm:$0xff] %v416
        %459 = vst [vmem:[%s117 + $0x118] sm:$0xff] %v417
        %460 = vst [vmem:[%s117 + $0x120] sm:$0x3] %v418
        %461 = vst [vmem:[%s117 + $0x128] sm:$0x3] %v419
        %462 = vst [vmem:[%s117 + $0x130] sm:$0x3] %v420
        %463 = vst [vmem:[%s117 + $0x138] sm:$0x3] %v421
        %464 = vst [vmem:[%s117 + $0x140] sm:$0x3] %v422
        %465 = vst [vmem:[%s117 + $0x148] sm:$0x3] %v423
        %s466 = smul.u32 1, 6
        %s467 = sshll.u32 %s466, 4
        %468 = dma.done %s131, %s467
        %s469 = sshll.u32 %s466, 4
        %470 = dma.done %s150, %s469
        %s471 = sshll.u32 %s466, 4
        %472 = dma.done %s169, %s471
        %s473 = sshll.u32 %s466, 4
        %474 = dma.done %s188, %s473
        %s475 = sshll.u32 %s466, 4
        %476 = dma.done %s207, %s475
        %s477 = sshll.u32 %s466, 4
        %478 = dma.done %s226, %s477
        %v479 = vld [vmem:[#allocation2 + $0x60] sm:$0x3f]
        %v480 = vld [vmem:[#allocation2 + $0x68] sm:$0x3f]
        %v481 = vld [vmem:[#allocation2 + $0x70] sm:$0x3f]
        %v482 = vld [vmem:[#allocation2 + $0x78] sm:$0x3f]
        %v483 = vld [vmem:[#allocation2 + $0x80] sm:$0x3f]
        %v484 = vld [vmem:[#allocation2 + $0x88] sm:$0x3f]
        %v491 = vrot.slane %v479, 6
        %v492 = vrot.slane %v480, 6
        %v493 = vrot.slane %v481, 6
        %v494 = vrot.slane %v482, 6
        %v495 = vrot.slane %v483, 6
        %v496 = vrot.slane %v484, 6
        %503 = vst [vmem:[%s117 + $0x120] sm:$0xfc] %v491
        %504 = vst [vmem:[%s117 + $0x128] sm:$0xfc] %v492
        %505 = vst [vmem:[%s117 + $0x130] sm:$0xfc] %v493
        %506 = vst [vmem:[%s117 + $0x138] sm:$0xfc] %v494
        %507 = vst [vmem:[%s117 + $0x140] sm:$0xfc] %v495
        %508 = vst [vmem:[%s117 + $0x148] sm:$0xfc] %v496
        loop: start=0, step=1, limit=2
        $region29: #{tpu_custom_call.1} parent=23 // loop_pre_header
          _
        $region30: #{tpu_custom_call.1} parent=23 // loop_header
          %s510 = sphi 0, %s514
          %p511 = scmp.ge.s32.totalorder %s510, 2
        $region31: #{tpu_custom_call.1} parent=23 // loop_header_branch
          %513 = sbr.rel (%p511) target = $region35
        $region32: #{tpu_custom_call.1} parent=23 // loop_body
          %p515 = scmp.lt.s32.totalorder %s510, 0
          %s516 = ssub.s32 0, %s510
          %s517 = scalar_select %p515, %s516, %s510
          %s518 = sand.u32 %s517, 1
          %s519 = ssub.s32 0, %s518
          %s520 = scalar_select %p515, %s519, %s518
          %p521 = scmp.ne.s32.totalorder %s520, 0
          %p522 = scmp.lt.s32.totalorder %s520, 0
          %p523 = pnand %p522, %p521
          %p524 = pneg %p523
          %s525 = sadd.s32 %s520, 2
          %s526 = scalar_select %p524, %s525, %s520
          %s527 = sadd.s32 %s510, 1
          %p528 = scmp.lt.s32.totalorder %s527, 2
          // Predicated region
          $region36: #{tpu_custom_call.1} parent=32 // pred_check
            %p529 = pneg %p528
          $region37: #{tpu_custom_call.1} parent=32 // pred_check_branch
            %531 = sbr.rel (%p529) target = $region39
          $region38: #{tpu_custom_call.1} parent=32 // pred_region
            %s532 = ssub.s32 1, %s526
            %s533 = smul.u32 %s527, 8
            %s534 = sadd.s32 %s533, 6
            %s535 = smul.u32 %s532, 8
            %s536 = sshra.s32 %s534, 7
            %s537 = sand.u32 %s534, 127
            %s538 = sadd.s32 %s536, %s19
            %s539 = smul.u32 %s538, 128
            %s540 = sshra.s32 %s534, 7
            %s541 = sand.u32 %s534, 127
            %s542 = sadd.s32 %s539, %s541
            %s543 = sld [smem:[#allocation5 + %s542]]
            %p544 = scmp.gt.s32.totalorder %s543, 0
            %s545 = scalar_select %p544, %s543, 0
            %p546 = scmp.lt.s32.totalorder %s545, 511
            %s547 = scalar_select %p546, %s545, 511
            %s548 = sshrl.u32 %s547, 3
            %s549 = sand.u32 %s547, 7
            %s550 = smul.u32 %s548, 48
            %s551 = sadd.s32 %s549, %s550
            %s552 = smul.addr %s551, 16
            %s553 = scalar_lea.hbm %s2, %s552
            %s554 = sshrl.u32 %s535, 3
            %s555 = sand.u32 %s535, 7
            %s556 = smul.u32 %s554, 48
            %s557 = sadd.s32 %s555, %s556
            %s558 = scalar_lea.vmem [#allocation2], %s557
            %s559 = scalar_lea.sflag [#allocation3], %s535
            %s561 = sshll.u32 %s558, 4
            %s562 = int_to_ptr.vmem [resolvable:$true] %s561
            %564 = dma.hbm_to_vmem [thread:$0]  %s553, 96, %s562, %s559, 128, 128, 1
            %s565 = sadd.s32 %s533, 7
            %s566 = sadd.s32 %s535, 1
            %s567 = sshra.s32 %s565, 7
            %s568 = sand.u32 %s565, 127
            %s569 = sadd.s32 %s567, %s19
            %s570 = smul.u32 %s569, 128
            %s571 = sshra.s32 %s565, 7
            %s572 = sand.u32 %s565, 127
            %s573 = sadd.s32 %s570, %s572
            %s574 = sld [smem:[#allocation5 + %s573]]
            %p575 = scmp.gt.s32.totalorder %s574, 0
            %s576 = scalar_select %p575, %s574, 0
            %p577 = scmp.lt.s32.totalorder %s576, 511
            %s578 = scalar_select %p577, %s576, 511
            %s579 = sshrl.u32 %s578, 3
            %s580 = sand.u32 %s578, 7
            %s581 = smul.u32 %s579, 48
            %s582 = sadd.s32 %s580, %s581
            %s583 = smul.addr %s582, 16
            %s584 = scalar_lea.hbm %s2, %s583
            %s585 = sshrl.u32 %s566, 3
            %s586 = sand.u32 %s566, 7
            %s587 = smul.u32 %s585, 48
            %s588 = sadd.s32 %s586, %s587
            %s589 = scalar_lea.vmem [#allocation2], %s588
            %s590 = scalar_lea.sflag [#allocation3], %s566
            %s592 = sshll.u32 %s589, 4
            %s593 = int_to_ptr.vmem [resolvable:$true] %s592
            %595 = dma.hbm_to_vmem [thread:$0]  %s584, 96, %s593, %s590, 128, 128, 1
            %s596 = sadd.s32 %s533, 8
            %s597 = sadd.s32 %s535, 2
            %s598 = sshra.s32 %s596, 7
            %s599 = sand.u32 %s596, 127
            %s600 = sadd.s32 %s598, %s19
            %s601 = smul.u32 %s600, 128
            %s602 = sshra.s32 %s596, 7
            %s603 = sand.u32 %s596, 127
            %s604 = sadd.s32 %s601, %s603
            %s605 = sld [smem:[#allocation5 + %s604]]
            %p606 = scmp.gt.s32.totalorder %s605, 0
            %s607 = scalar_select %p606, %s605, 0
            %p608 = scmp.lt.s32.totalorder %s607, 511
            %s609 = scalar_select %p608, %s607, 511
            %s610 = sshrl.u32 %s609, 3
            %s611 = sand.u32 %s609, 7
            %s612 = smul.u32 %s610, 48
            %s613 = sadd.s32 %s611, %s612
            %s614 = smul.addr %s613, 16
            %s615 = scalar_lea.hbm %s2, %s614
            %s616 = sshrl.u32 %s597, 3
            %s617 = sand.u32 %s597, 7
            %s618 = smul.u32 %s616, 48
            %s619 = sadd.s32 %s617, %s618
            %s620 = scalar_lea.vmem [#allocation2], %s619
            %s621 = scalar_lea.sflag [#allocation3], %s597
            %s623 = sshll.u32 %s620, 4
            %s624 = int_to_ptr.vmem [resolvable:$true] %s623
            %626 = dma.hbm_to_vmem [thread:$0]  %s615, 96, %s624, %s621, 128, 128, 1
            %s627 = sadd.s32 %s533, 9
            %s628 = sadd.s32 %s535, 3
            %s629 = sshra.s32 %s627, 7
            %s630 = sand.u32 %s627, 127
            %s631 = sadd.s32 %s629, %s19
            %s632 = smul.u32 %s631, 128
            %s633 = sshra.s32 %s627, 7
            %s634 = sand.u32 %s627, 127
            %s635 = sadd.s32 %s632, %s634
            %s636 = sld [smem:[#allocation5 + %s635]]
            %p637 = scmp.gt.s32.totalorder %s636, 0
            %s638 = scalar_select %p637, %s636, 0
            %p639 = scmp.lt.s32.totalorder %s638, 511
            %s640 = scalar_select %p639, %s638, 511
            %s641 = sshrl.u32 %s640, 3
            %s642 = sand.u32 %s640, 7
            %s643 = smul.u32 %s641, 48
            %s644 = sadd.s32 %s642, %s643
            %s645 = smul.addr %s644, 16
            %s646 = scalar_lea.hbm %s2, %s645
            %s647 = sshrl.u32 %s628, 3
            %s648 = sand.u32 %s628, 7
            %s649 = smul.u32 %s647, 48
            %s650 = sadd.s32 %s648, %s649
            %s651 = scalar_lea.vmem [#allocation2], %s650
            %s652 = scalar_lea.sflag [#allocation3], %s628
            %s654 = sshll.u32 %s651, 4
            %s655 = int_to_ptr.vmem [resolvable:$true] %s654
            %657 = dma.hbm_to_vmem [thread:$0]  %s646, 96, %s655, %s652, 128, 128, 1
            %s658 = sadd.s32 %s533, 10
            %s659 = sadd.s32 %s535, 4
            %s660 = sshra.s32 %s658, 7
            %s661 = sand.u32 %s658, 127
            %s662 = sadd.s32 %s660, %s19
            %s663 = smul.u32 %s662, 128
            %s664 = sshra.s32 %s658, 7
            %s665 = sand.u32 %s658, 127
            %s666 = sadd.s32 %s663, %s665
            %s667 = sld [smem:[#allocation5 + %s666]]
            %p668 = scmp.gt.s32.totalorder %s667, 0
            %s669 = scalar_select %p668, %s667, 0
            %p670 = scmp.lt.s32.totalorder %s669, 511
            %s671 = scalar_select %p670, %s669, 511
            %s672 = sshrl.u32 %s671, 3
            %s673 = sand.u32 %s671, 7
            %s674 = smul.u32 %s672, 48
            %s675 = sadd.s32 %s673, %s674
            %s676 = smul.addr %s675, 16
            %s677 = scalar_lea.hbm %s2, %s676
            %s678 = sshrl.u32 %s659, 3
            %s679 = sand.u32 %s659, 7
            %s680 = smul.u32 %s678, 48
            %s681 = sadd.s32 %s679, %s680
            %s682 = scalar_lea.vmem [#allocation2], %s681
            %s683 = scalar_lea.sflag [#allocation3], %s659
            %s685 = sshll.u32 %s682, 4
            %s686 = int_to_ptr.vmem [resolvable:$true] %s685
            %688 = dma.hbm_to_vmem [thread:$0]  %s677, 96, %s686, %s683, 128, 128, 1
            %s689 = sadd.s32 %s533, 11
            %s690 = sadd.s32 %s535, 5
            %s691 = sshra.s32 %s689, 7
            %s692 = sand.u32 %s689, 127
            %s693 = sadd.s32 %s691, %s19
            %s694 = smul.u32 %s693, 128
            %s695 = sshra.s32 %s689, 7
            %s696 = sand.u32 %s689, 127
            %s697 = sadd.s32 %s694, %s696
            %s698 = sld [smem:[#allocation5 + %s697]]
            %p699 = scmp.gt.s32.totalorder %s698, 0
            %s700 = scalar_select %p699, %s698, 0
            %p701 = scmp.lt.s32.totalorder %s700, 511
            %s702 = scalar_select %p701, %s700, 511
            %s703 = sshrl.u32 %s702, 3
            %s704 = sand.u32 %s702, 7
            %s705 = smul.u32 %s703, 48
            %s706 = sadd.s32 %s704, %s705
            %s707 = smul.addr %s706, 16
            %s708 = scalar_lea.hbm %s2, %s707
            %s709 = sshrl.u32 %s690, 3
            %s710 = sand.u32 %s690, 7
            %s711 = smul.u32 %s709, 48
            %s712 = sadd.s32 %s710, %s711
            %s713 = scalar_lea.vmem [#allocation2], %s712
            %s714 = scalar_lea.sflag [#allocation3], %s690
            %s716 = sshll.u32 %s713, 4
            %s717 = int_to_ptr.vmem [resolvable:$true] %s716
            %719 = dma.hbm_to_vmem [thread:$0]  %s708, 96, %s717, %s714, 128, 128, 1
            %s720 = sadd.s32 %s533, 12
            %s721 = sadd.s32 %s535, 6
            %s722 = sshra.s32 %s720, 7
            %s723 = sand.u32 %s720, 127
            %s724 = sadd.s32 %s722, %s19
            %s725 = smul.u32 %s724, 128
            %s726 = sshra.s32 %s720, 7
            %s727 = sand.u32 %s720, 127
            %s728 = sadd.s32 %s725, %s727
            %s729 = sld [smem:[#allocation5 + %s728]]
            %p730 = scmp.gt.s32.totalorder %s729, 0
            %s731 = scalar_select %p730, %s729, 0
            %p732 = scmp.lt.s32.totalorder %s731, 511
            %s733 = scalar_select %p732, %s731, 511
            %s734 = sshrl.u32 %s733, 3
            %s735 = sand.u32 %s733, 7
            %s736 = smul.u32 %s734, 48
            %s737 = sadd.s32 %s735, %s736
            %s738 = smul.addr %s737, 16
            %s739 = scalar_lea.hbm %s2, %s738
            %s740 = sshrl.u32 %s721, 3
            %s741 = sand.u32 %s721, 7
            %s742 = smul.u32 %s740, 48
            %s743 = sadd.s32 %s741, %s742
            %s744 = scalar_lea.vmem [#allocation2], %s743
            %s745 = scalar_lea.sflag [#allocation3], %s721
            %s747 = sshll.u32 %s744, 4
            %s748 = int_to_ptr.vmem [resolvable:$true] %s747
            %750 = dma.hbm_to_vmem [thread:$0]  %s739, 96, %s748, %s745, 128, 128, 1
            %s751 = sadd.s32 %s533, 13
            %s752 = sadd.s32 %s535, 7
            %s753 = sshra.s32 %s751, 7
            %s754 = sand.u32 %s751, 127
            %s755 = sadd.s32 %s753, %s19
            %s756 = smul.u32 %s755, 128
            %s757 = sshra.s32 %s751, 7
            %s758 = sand.u32 %s751, 127
            %s759 = sadd.s32 %s756, %s758
            %s760 = sld [smem:[#allocation5 + %s759]]
            %p761 = scmp.gt.s32.totalorder %s760, 0
            %s762 = scalar_select %p761, %s760, 0
            %p763 = scmp.lt.s32.totalorder %s762, 511
            %s764 = scalar_select %p763, %s762, 511
            %s765 = sshrl.u32 %s764, 3
            %s766 = sand.u32 %s764, 7
            %s767 = smul.u32 %s765, 48
            %s768 = sadd.s32 %s766, %s767
            %s769 = smul.addr %s768, 16
            %s770 = scalar_lea.hbm %s2, %s769
            %s771 = sshrl.u32 %s752, 3
            %s772 = sand.u32 %s752, 7
            %s773 = smul.u32 %s771, 48
            %s774 = sadd.s32 %s772, %s773
            %s775 = scalar_lea.vmem [#allocation2], %s774
            %s776 = scalar_lea.sflag [#allocation3], %s752
            %s778 = sshll.u32 %s775, 4
            %s779 = int_to_ptr.vmem [resolvable:$true] %s778
            %781 = dma.hbm_to_vmem [thread:$0]  %s770, 96, %s779, %s776, 128, 128, 1
          $region39: #{tpu_custom_call.1} parent=32 // pred_fallthru
            _
          %s782 = smul.u32 %s526, 8
          %s783 = scalar_lea.sflag [#allocation3], %s782
          %s784 = sshll.u32 %s466, 4
          %785 = dma.done %s783, %s784
          %s786 = sadd.s32 %s782, 1
          %s787 = scalar_lea.sflag [#allocation3], %s786
          %s788 = sshll.u32 %s466, 4
          %789 = dma.done %s787, %s788
          %s790 = sadd.s32 %s782, 2
          %s791 = scalar_lea.sflag [#allocation3], %s790
          %s792 = sshll.u32 %s466, 4
          %793 = dma.done %s791, %s792
          %s794 = sadd.s32 %s782, 3
          %s795 = scalar_lea.sflag [#allocation3], %s794
          %s796 = sshll.u32 %s466, 4
          %797 = dma.done %s795, %s796
          %s798 = sadd.s32 %s782, 4
          %s799 = scalar_lea.sflag [#allocation3], %s798
          %s800 = sshll.u32 %s466, 4
          %801 = dma.done %s799, %s800
          %s802 = sadd.s32 %s782, 5
          %s803 = scalar_lea.sflag [#allocation3], %s802
          %s804 = sshll.u32 %s466, 4
          %805 = dma.done %s803, %s804
          %s806 = sadd.s32 %s782, 6
          %s807 = scalar_lea.sflag [#allocation3], %s806
          %s808 = sshll.u32 %s466, 4
          %809 = dma.done %s807, %s808
          %s810 = sadd.s32 %s782, 7
          %s811 = scalar_lea.sflag [#allocation3], %s810
          %s812 = sshll.u32 %s466, 4
          %813 = dma.done %s811, %s812
          %s814 = smul.u32 %s510, 8
          %s815 = sadd.s32 %s814, 56
          %s816 = sshra.s32 %s782, 3
          %s817 = sand.u32 %s782, 7
          %s818 = smul.u32 %s816, 6
          %s819 = smul.addr %s818, 8
          %s820 = scalar_lea.vmem [#allocation2], %s819
          %v821 = vld [vmem:[%s820] sm:$0xff]
          %v822 = vld [vmem:[%s820 + $0x8] sm:$0xff]
          %v823 = vld [vmem:[%s820 + $0x10] sm:$0xff]
          %v824 = vld [vmem:[%s820 + $0x18] sm:$0xff]
          %v825 = vld [vmem:[%s820 + $0x20] sm:$0xff]
          %v826 = vld [vmem:[%s820 + $0x28] sm:$0xff]
          %s827 = sshra.s32 %s815, 3
          %s828 = sand.u32 %s815, 7
          %s829 = smul.u32 %s827, 6
          %s830 = smul.addr %s829, 8
          %s831 = scalar_lea.vmem %s117, %s830
          %832 = vst [vmem:[%s831] sm:$0xff] %v821
          %833 = vst [vmem:[%s831 + $0x8] sm:$0xff] %v822
          %834 = vst [vmem:[%s831 + $0x10] sm:$0xff] %v823
          %835 = vst [vmem:[%s831 + $0x18] sm:$0xff] %v824
          %836 = vst [vmem:[%s831 + $0x20] sm:$0xff] %v825
          %837 = vst [vmem:[%s831 + $0x28] sm:$0xff] %v826
        $region33: #{tpu_custom_call.1} parent=23 // loop_footer
          %s514 = sadd.s32 1, %s510
        $region34: #{tpu_custom_call.1} parent=23 // loop_footer_branch
          %509 = sbr.rel target = $region30
        $region35: #{tpu_custom_call.1} parent=23 // loop_exit
          _
        %s838 = sadd.s32 %s118, 22
        %s839 = sld [smem:[#allocation5 + %s838]]
        %p840 = scmp.gt.s32.totalorder %s839, 0
        %s841 = scalar_select %p840, %s839, 0
        %p842 = scmp.lt.s32.totalorder %s841, 511
        %s843 = scalar_select %p842, %s841, 511
        %s844 = sshrl.u32 %s843, 3
        %s845 = sand.u32 %s843, 7
        %s846 = smul.u32 %s844, 48
        %s847 = sadd.s32 %s845, %s846
        %s848 = smul.addr %s847, 16
        %s849 = scalar_lea.hbm %s2, %s848
        %s851 = sshll.u32 %s130, 4
        %s852 = int_to_ptr.vmem [resolvable:$true] %s851
        %854 = dma.hbm_to_vmem [thread:$0]  %s849, 96, %s852, %s131, 128, 128, 1
        %s855 = sadd.s32 %s118, 23
        %s856 = sld [smem:[#allocation5 + %s855]]
        %p857 = scmp.gt.s32.totalorder %s856, 0
        %s858 = scalar_select %p857, %s856, 0
        %p859 = scmp.lt.s32.totalorder %s858, 511
        %s860 = scalar_select %p859, %s858, 511
        %s861 = sshrl.u32 %s860, 3
        %s862 = sand.u32 %s860, 7
        %s863 = smul.u32 %s861, 48
        %s864 = sadd.s32 %s862, %s863
        %s865 = smul.addr %s864, 16
        %s866 = scalar_lea.hbm %s2, %s865
        %s868 = sshll.u32 %s149, 4
        %s869 = int_to_ptr.vmem [resolvable:$true] %s868
        %871 = dma.hbm_to_vmem [thread:$0]  %s866, 96, %s869, %s150, 128, 128, 1
        %s872 = sadd.s32 %s118, 24
        %s873 = sld [smem:[#allocation5 + %s872]]
        %p874 = scmp.gt.s32.totalorder %s873, 0
        %s875 = scalar_select %p874, %s873, 0
        %p876 = scmp.lt.s32.totalorder %s875, 511
        %s877 = scalar_select %p876, %s875, 511
        %s878 = sshrl.u32 %s877, 3
        %s879 = sand.u32 %s877, 7
        %s880 = smul.u32 %s878, 48
        %s881 = sadd.s32 %s879, %s880
        %s882 = smul.addr %s881, 16
        %s883 = scalar_lea.hbm %s2, %s882
        %s885 = sshll.u32 %s168, 4
        %s886 = int_to_ptr.vmem [resolvable:$true] %s885
        %888 = dma.hbm_to_vmem [thread:$0]  %s883, 96, %s886, %s169, 128, 128, 1
        %s889 = sadd.s32 %s118, 25
        %s890 = sld [smem:[#allocation5 + %s889]]
        %p891 = scmp.gt.s32.totalorder %s890, 0
        %s892 = scalar_select %p891, %s890, 0
        %p893 = scmp.lt.s32.totalorder %s892, 511
        %s894 = scalar_select %p893, %s892, 511
        %s895 = sshrl.u32 %s894, 3
        %s896 = sand.u32 %s894, 7
        %s897 = smul.u32 %s895, 48
        %s898 = sadd.s32 %s896, %s897
        %s899 = smul.addr %s898, 16
        %s900 = scalar_lea.hbm %s2, %s899
        %s902 = sshll.u32 %s187, 4
        %s903 = int_to_ptr.vmem [resolvable:$true] %s902
        %905 = dma.hbm_to_vmem [thread:$0]  %s900, 96, %s903, %s188, 128, 128, 1
        %s906 = sshll.u32 %s466, 4
        %907 = dma.done %s131, %s906
        %s908 = sshll.u32 %s466, 4
        %909 = dma.done %s150, %s908
        %s910 = sshll.u32 %s466, 4
        %911 = dma.done %s169, %s910
        %s912 = sshll.u32 %s466, 4
        %913 = dma.done %s188, %s912
        %v914 = vld [vmem:[#allocation2 + $0x60] sm:$0xf]
        %v915 = vld [vmem:[#allocation2 + $0x68] sm:$0xf]
        %v916 = vld [vmem:[#allocation2 + $0x70] sm:$0xf]
        %v917 = vld [vmem:[#allocation2 + $0x78] sm:$0xf]
        %v918 = vld [vmem:[#allocation2 + $0x80] sm:$0xf]
        %v919 = vld [vmem:[#allocation2 + $0x88] sm:$0xf]
        %920 = vst [vmem:[%s117 + $0x1b0] sm:$0xf] %v914
        %921 = vst [vmem:[%s117 + $0x1b8] sm:$0xf] %v915
        %922 = vst [vmem:[%s117 + $0x1c0] sm:$0xf] %v916
        %923 = vst [vmem:[%s117 + $0x1c8] sm:$0xf] %v917
        %924 = vst [vmem:[%s117 + $0x1d0] sm:$0xf] %v918
        %925 = vst [vmem:[%s117 + $0x1d8] sm:$0xf] %v919
        %p926 = scmp.lt.s32.totalorder %s19, 1
        %s927 = scalar_select %p926, %s19, 1
        %s928 = smul.addr %s927, 60
        %s929 = smul.addr %s928, 8
        %s930 = scalar_lea.vmem %s3, %s929
        // Predicated region
        $region40: #{tpu_custom_call.1} parent=23 // pred_check
          %p931 = pneg %p58
        $region41: #{tpu_custom_call.1} parent=23 // pred_check_branch
          %933 = sbr.rel (%p931) target = $region43
        $region42: #{tpu_custom_call.1} parent=23 // pred_region
          _
        $region43: #{tpu_custom_call.1} parent=23 // pred_fallthru
          _
      $region24: #{tpu_custom_call.1} parent=5 // pred_fallthru
        _
      %p934 = scmp.le.s32.totalorder 2, %s14
      // Predicated region
      $region44: #{tpu_custom_call.1} parent=5 // pred_check
        %p935 = pneg %p934
      $region45: #{tpu_custom_call.1} parent=5 // pred_check_branch
        %937 = sbr.rel (%p935) target = $region47
      $region46: #{tpu_custom_call.1} parent=5 // pred_region
        %s938 = ssub.s32 %s14, 2
        // Predicated region
        $region48: #{tpu_custom_call.1} parent=46 // pred_check
          %p939 = pneg %p64
        $region49: #{tpu_custom_call.1} parent=46 // pred_check_branch
          %941 = sbr.rel (%p939) target = $region51
        $region50: #{tpu_custom_call.1} parent=46 // pred_region
          %p942 = scmp.lt.s32.totalorder %s20, 1
          %s943 = scalar_select %p942, %s20, 1
          %s944 = smul.addr %s943, 60
          %s945 = smul.addr %s944, 8
          %s946 = scalar_lea.vmem %s3, %s945
        $region51: #{tpu_custom_call.1} parent=46 // pred_fallthru
          _
      $region47: #{tpu_custom_call.1} parent=5 // pred_fallthru
        _
    $region6: #{tpu_custom_call.1} parent=1 // loop_footer
      %s18 = sadd.s32 1, %s14
    $region7: #{tpu_custom_call.1} parent=1 // loop_footer_branch
      %13 = sbr.rel target = $region3
    $region8: #{tpu_custom_call.1} parent=1 // loop_exit
      _
    %947 = vsyncpa [#allocation7], 1
    %s948 = scalar_lea.sflag [#allocation7], 1
    %949 = vsyncpa %s948, 1
  %950 = vsyncmov [#allocation3]
  %s951 = vpop.sfrf %950
  %p952 = scmp.eq.s32.totalorder %s951, 0
  %p953 = pneg %p952
  %955 = shalt.err (%p953)
  %s956 = scalar_lea.sflag [#allocation3], 1
  %957 = vsyncmov %s956
  %s958 = vpop.sfrf %957
  %p959 = scmp.eq.s32.totalorder %s958, 0
  %p960 = pneg %p959
  %962 = shalt.err (%p960)
  %s963 = scalar_lea.sflag [#allocation3], 2
  %964 = vsyncmov %s963
  %s965 = vpop.sfrf %964
  %p966 = scmp.eq.s32.totalorder %s965, 0
  %p967 = pneg %p966
  %969 = shalt.err (%p967)
  %s970 = scalar_lea.sflag [#allocation3], 3
  %971 = vsyncmov %s970
  %s972 = vpop.sfrf %971
  %p973 = scmp.eq.s32.totalorder %s972, 0
  %p974 = pneg %p973
  %976 = shalt.err (%p974)
  %s977 = scalar_lea.sflag [#allocation3], 4
  %978 = vsyncmov %s977
  %s979 = vpop.sfrf %978
  %p980 = scmp.eq.s32.totalorder %s979, 0
  %p981 = pneg %p980
  %983 = shalt.err (%p981)
  %s984 = scalar_lea.sflag [#allocation3], 5
  %985 = vsyncmov %s984
  %s986 = vpop.sfrf %985
  %p987 = scmp.eq.s32.totalorder %s986, 0
  %p988 = pneg %p987
  %990 = shalt.err (%p988)
  %s991 = scalar_lea.sflag [#allocation3], 6
  %992 = vsyncmov %s991
  %s993 = vpop.sfrf %992
  %p994 = scmp.eq.s32.totalorder %s993, 0
  %p995 = pneg %p994
  %997 = shalt.err (%p995)
  %s998 = scalar_lea.sflag [#allocation3], 7
  %999 = vsyncmov %s998
  %s1000 = vpop.sfrf %999
  %p1001 = scmp.eq.s32.totalorder %s1000, 0
  %p1002 = pneg %p1001
  %1004 = shalt.err (%p1002)
  %s1005 = scalar_lea.sflag [#allocation3], 8
  %1006 = vsyncmov %s1005
  %s1007 = vpop.sfrf %1006
  %p1008 = scmp.eq.s32.totalorder %s1007, 0
  %p1009 = pneg %p1008
  %1011 = shalt.err (%p1009)
  %s1012 = scalar_lea.sflag [#allocation3], 9
  %1013 = vsyncmov %s1012
  %s1014 = vpop.sfrf %1013
  %p1015 = scmp.eq.s32.totalorder %s1014, 0
  %p1016 = pneg %p1015
  %1018 = shalt.err (%p1016)
  %s1019 = scalar_lea.sflag [#allocation3], 10
  %1020 = vsyncmov %s1019
  %s1021 = vpop.sfrf %1020
  %p1022 = scmp.eq.s32.totalorder %s1021, 0
  %p1023 = pneg %p1022
  %1025 = shalt.err (%p1023)
  %s1026 = scalar_lea.sflag [#allocation3], 11
  %1027 = vsyncmov %s1026
  %s1028 = vpop.sfrf %1027
  %p1029 = scmp.eq.s32.totalorder %s1028, 0
  %p1030 = pneg %p1029
  %1032 = shalt.err (%p1030)
  %s1033 = scalar_lea.sflag [#allocation3], 12
  %1034 = vsyncmov %s1033
  %s1035 = vpop.sfrf %1034
  %p1036 = scmp.eq.s32.totalorder %s1035, 0
  %p1037 = pneg %p1036
  %1039 = shalt.err (%p1037)
  %s1040 = scalar_lea.sflag [#allocation3], 13
  %1041 = vsyncmov %s1040
  %s1042 = vpop.sfrf %1041
  %p1043 = scmp.eq.s32.totalorder %s1042, 0
  %p1044 = pneg %p1043
  %1046 = shalt.err (%p1044)
  %s1047 = scalar_lea.sflag [#allocation3], 14
  %1048 = vsyncmov %s1047
  %s1049 = vpop.sfrf %1048
  %p1050 = scmp.eq.s32.totalorder %s1049, 0
  %p1051 = pneg %p1050
  %1053 = shalt.err (%p1051)
  %s1054 = scalar_lea.sflag [#allocation3], 15
  %1055 = vsyncmov %s1054
  %s1056 = vpop.sfrf %1055
  %p1057 = scmp.eq.s32.totalorder %s1056, 0
  %p1058 = pneg %p1057
  %1060 = shalt.err (%p1058)
  %s1061 = scalar_lea.sflag [#allocation3], 16
  %1062 = vsyncmov %s1061
  %s1063 = vpop.sfrf %1062
  %p1064 = scmp.eq.s32.totalorder %s1063, 0
  %p1065 = pneg %p1064
  %1067 = shalt.err (%p1065)
  %s1068 = scalar_lea.sflag [#allocation3], 17
  %1069 = vsyncmov %s1068
  %s1070 = vpop.sfrf %1069
  %p1071 = scmp.eq.s32.totalorder %s1070, 0
  %p1072 = pneg %p1071
  %1074 = shalt.err (%p1072)
  %s1075 = scalar_lea.sflag [#allocation3], 18
  %1076 = vsyncmov %s1075
  %s1077 = vpop.sfrf %1076
  %p1078 = scmp.eq.s32.totalorder %s1077, 0
  %p1079 = pneg %p1078
  %1081 = shalt.err (%p1079)
  %s1082 = scalar_lea.sflag [#allocation3], 19
  %1083 = vsyncmov %s1082
  %s1084 = vpop.sfrf %1083
  %p1085 = scmp.eq.s32.totalorder %s1084, 0
  %p1086 = pneg %p1085
  %1088 = shalt.err (%p1086)
  %s1089 = scalar_lea.sflag [#allocation3], 20
  %1090 = vsyncmov %s1089
  %s1091 = vpop.sfrf %1090
  %p1092 = scmp.eq.s32.totalorder %s1091, 0
  %p1093 = pneg %p1092
  %1095 = shalt.err (%p1093)
  %s1096 = scalar_lea.sflag [#allocation3], 21
  %1097 = vsyncmov %s1096
  %s1098 = vpop.sfrf %1097
  %p1099 = scmp.eq.s32.totalorder %s1098, 0
  %p1100 = pneg %p1099
  %1102 = shalt.err (%p1100)
  %s1103 = scalar_lea.sflag [#allocation3], 22
  %1104 = vsyncmov %s1103
  %s1105 = vpop.sfrf %1104
  %p1106 = scmp.eq.s32.totalorder %s1105, 0
  %p1107 = pneg %p1106
  %1109 = shalt.err (%p1107)
  %s1110 = scalar_lea.sflag [#allocation3], 23
  %1111 = vsyncmov %s1110
  %s1112 = vpop.sfrf %1111
  %p1113 = scmp.eq.s32.totalorder %s1112, 0
  %p1114 = pneg %p1113
  %1116 = shalt.err (%p1114)

</llo_original>
